<compile_context>
chip_gen: v7x
topology: tpu7x:2x2x1
jax: 0.10.0
libtpu: 0.0.40
codegen_flags: <defaults>
</compile_context>

<pallas_src>
import functools

import numpy as np

import jax
import jax.numpy as jnp
from jax.experimental import pallas as pl
from jax.experimental.pallas import tpu as pltpu


# --------------------------------------------------------------------------- #
# hardware / tile selection
# --------------------------------------------------------------------------- #
def _vmem_capacity_bytes():
    """Physical VMEM of the local chip; conservative 64 MiB fallback."""
    try:
        return int(pltpu.get_tpu_info().vmem_capacity_bytes)
    except Exception:
        return 64 * 1024 * 1024


def _default_hw_tile(hw, c_in, c_out, itemsize, budget):
    """Pick a lane-tile over the flattened spatial axis.

    bytes-per-lane-column accounting (worst of the two passes):
      * double-buffered s/t input tiles:   2 * 2 * itemsize * (Cin + Cout)
      * in-kernel f32 casts of s/t:        4 * (Cin + Cout)
      * ~7 Cout-tall f32 intermediates:    28 * Cout
      * pass-2 full-tile f32 accumulator:  4 * Cout
    """
    bytes_per_col = (4 * itemsize + 4) * (c_in + c_out) + 32 * c_out
    max_cols = max(128, budget // bytes_per_col)
    if hw <= max_cols:
        return hw                               # full extent: always legal
    max_tile = max(128, (max_cols // 128) * 128)
    # Prefer a multiple-of-128 divisor of hw so the ragged-tile mask path is
    # never needed (pure VPU saving on every iteration).
    t = max_tile
    lo = max(128, max_tile // 2)
    while t >= lo:
        if hw % t == 0:
            return t
        t -= 128
    return max_tile


# --------------------------------------------------------------------------- #
# in-kernel helpers
# --------------------------------------------------------------------------- #
def _conv1x1(wm, s, c_in):
    """1x1 conv: wm (Cout, Cin) @ s (Cin, THW) -> (Cout, THW), f32 accumulate.

    For very small Cin an unrolled VPU broadcast MAC is cheaper than waking the
    MXU; from Cin >= 16 the MXU does the work in the extended slot for free.
    """
    if c_in < 16:
        y = wm[:, 0:1] * s[0:1, :]
        for ci in range(1, c_in):
            y = y + wm[:, ci:ci + 1] * s[ci:ci + 1, :]
        return y
    return jnp.dot(wm, s, preferred_element_type=jnp.float32)


def _make_stats_kernel(c_in, c_out, hw, thw, nt_c, needs_mask):
    """Pass 1: per-(batch, chunk) stacked stats [neg_sum, neg_cnt, S1, S2, shift]."""

    def kernel(s_ref, t_ref, w_ref, stats_ref):
        sp = pl.program_id(1)
        j = pl.program_id(2)
        j_glob = sp * nt_c + j

        s = s_ref[0].astype(jnp.float32)          # (Cin,  THW)
        t = t_ref[0].astype(jnp.float32)          # (Cout, THW)
        wm = w_ref[...]                           # (Cout, Cin) f32

        y = _conv1x1(wm, s, c_in)                 # (Cout, THW)

        if needs_mask:
            col = jax.lax.broadcasted_iota(jnp.int32, (1, thw), 1) + j_glob * thw
            valid = col < hw
            is_neg = jnp.logical_and(t < 0.0, valid)
            y = jnp.where(valid, y, 0.0)
            cnt = jnp.minimum(thw, hw - j_glob * thw).astype(jnp.float32)
        else:
            is_neg = t < 0.0
            cnt = float(thw)
        t_neg = jnp.where(is_neg, t, 0.0)

        @pl.when(j == 0)
        def _():
            # Reset the resident accumulator and record this chunk's shift
            # (first-tile channel mean) in column 4.
            stats_ref[...] = jnp.zeros_like(stats_ref)
            stats_ref[0, 0, :, 4:5] = jnp.sum(y, axis=1, keepdims=True) / cnt

        shift = stats_ref[0, 0, :, 4:5]           # (Cout, 1)
        yc = y - shift
        if needs_mask:
            yc = jnp.where(valid, yc, 0.0)

        stats_ref[0, 0, :, 0:1] += jnp.sum(t_neg, axis=1, keepdims=True)
        stats_ref[0, 0, :, 1:2] += jnp.sum(is_neg.astype(jnp.float32),
                                           axis=1, keepdims=True)
        stats_ref[0, 0, :, 2:3] += jnp.sum(yc, axis=1, keepdims=True)
        stats_ref[0, 0, :, 3:4] += jnp.sum(yc * yc, axis=1, keepdims=True)

    return kernel


def _make_loss_kernel(c_in, c_out, hw, thw, nt_c, needs_mask):
    """Pass 2: masked L2 sum; VPU-only inner loop, reduce at the last tile."""

    def kernel(s_ref, t_ref, w_ref, margin_ref, mean_ref, istd_ref,
               loss_ref, acc_ref):
        sp = pl.program_id(1)
        j = pl.program_id(2)
        j_glob = sp * nt_c + j

        @pl.when(j == 0)
        def _():
            acc_ref[...] = jnp.zeros_like(acc_ref)

        s = s_ref[0].astype(jnp.float32)          # (Cin,  THW)
        t = t_ref[0].astype(jnp.float32)          # (Cout, THW)
        wm = w_ref[...]                           # (Cout, Cin)

        t_c = jnp.maximum(t, margin_ref[...])     # clamped teacher
        y = _conv1x1(wm, s, c_in)                 # 1x1 conv
        y_bn = (y - mean_ref[...]) * istd_ref[...]  # BN (train mode, gamma=1)

        d = y_bn - t_c
        # mask = 1 - ((y_bn <= t_c) & (t_c <= 0))  ==  (y_bn > t_c) | (t_c > 0)
        keep = jnp.logical_or(y_bn > t_c, t_c > 0.0)
        if needs_mask:
            col = jax.lax.broadcasted_iota(jnp.int32, (1, thw), 1) + j_glob * thw
            keep = jnp.logical_and(keep, col < hw)

        acc_ref[...] += jnp.where(keep, d * d, 0.0)   # pure VPU accumulate

        @pl.when(j == pl.num_programs(2) - 1)
        def _():
            loss_ref[...] = jnp.sum(acc_ref[...], axis=1, keepdims=True)[None, None]

    return kernel


# --------------------------------------------------------------------------- #
# wrapper
# --------------------------------------------------------------------------- #
def ofd_loss(fm_s, fm_t, conv_weight, *, stream_dtype=jnp.bfloat16, tile_hw=None):
    """fm_s: (N, Cin, H, W), fm_t: (N, Cout, H, W), conv_weight: (Cout, Cin, 1, 1).

    stream_dtype: dtype the feature maps are streamed through HBM in
    (bfloat16 by default -- halves HBM traffic; accumulation stays f32).
    tile_hw: optional spatial-tile override (must be a multiple of 128).
    """
    n, c_in, h, w_dim = fm_s.shape
    _, c_out, _, _ = fm_t.shape
    hw = h * w_dim
    m = n * hw

    # Free reshapes: NCHW -> (N, C, H*W); 1x1 conv weight -> (Cout, Cin).
    s3 = fm_s.reshape(n, c_in, hw).astype(stream_dtype)
    t3 = fm_t.reshape(n, c_out, hw).astype(stream_dtype)
    w2 = conv_weight.reshape(c_out, c_in).astype(jnp.float32)

    itemsize = int(np.dtype(stream_dtype).itemsize)
    vmem_cap = _vmem_capacity_bytes()

    if tile_hw is None:
        thw = _default_hw_tile(hw, c_in, c_out, itemsize, vmem_cap // 4)
    else:
        thw = min(int(tile_hw), hw)
        assert thw == hw or thw % 128 == 0, "tile_hw must be a multiple of 128"
    nt = pl.cdiv(hw, thw)
    # Spatial-chunk axis for dual-TC chips (v7x); only when it divides evenly
    # so no wasted tiles are introduced on single-core chips.
    n_sp = 2 if (nt % 2 == 0 and nt >= 2) else 1
    nt_c = nt // n_sp
    needs_mask = (n_sp * nt_c * thw) != hw

    grid = (n, n_sp, nt_c)

    s_spec = pl.BlockSpec((1, c_in, thw), lambda ni, sp, j: (ni, 0, sp * nt_c + j))
    t_spec = pl.BlockSpec((1, c_out, thw), lambda ni, sp, j: (ni, 0, sp * nt_c + j))
    w_spec = pl.BlockSpec((c_out, c_in), lambda ni, sp, j: (0, 0))
    param_spec = pl.BlockSpec((c_out, 1), lambda ni, sp, j: (0, 0))

    compiler_params = pltpu.CompilerParams(
        dimension_semantics=("parallel", "parallel", "arbitrary"),
        vmem_limit_bytes=int(vmem_cap * 0.8),
    )

    flops_mm = 2 * m * c_in * c_out
    bytes_in = itemsize * m * (c_in + c_out) + 4 * c_out * c_in

    # ---- pass 1: per-chunk statistics -------------------------------------- #
    stats = pl.pallas_call(
        _make_stats_kernel(c_in, c_out, hw, thw, nt_c, needs_mask),
        grid=grid,
        in_specs=[s_spec, t_spec, w_spec],
        out_specs=pl.BlockSpec((1, 1, c_out, 5), lambda ni, sp, j: (ni, sp, 0, 0)),
        out_shape=jax.ShapeDtypeStruct((n, n_sp, c_out, 5), jnp.float32),
        compiler_params=compiler_params,
        cost_estimate=pl.CostEstimate(
            flops=flops_mm + 8 * m * c_out,
            transcendentals=0,
            bytes_accessed=bytes_in),
    )(s3, t3, w2)

    neg_sum = stats[..., 0]                              # (n, n_sp, c_out)
    neg_cnt = stats[..., 1]
    s1 = stats[..., 2]
    s2 = stats[..., 3]
    shift = stats[..., 4]

    # ---- tiny global reductions + derived params (plain XLA, ~KBs) --------- #
    margin = neg_sum.sum(axis=(0, 1)) / (neg_cnt.sum(axis=(0, 1)) + 1e-6)

    # Chunk sizes (same for every batch); only the globally-last tile is ragged.
    chunk_cols = [min(nt_c * thw, hw - sp * nt_c * thw) for sp in range(n_sp)]
    m_c = jnp.asarray(chunk_cols, dtype=jnp.float32).reshape(1, n_sp, 1)

    # Chan-style combination of shifted per-chunk statistics (robust variance).
    mean_c = shift + s1 / m_c                            # per-chunk mean
    m2_c = s2 - (s1 * s1) / m_c                          # per-chunk sum of squares about mean
    total = float(m)
    mean = jnp.sum(m_c * mean_c, axis=(0, 1)) / total    # (c_out,)
    m2 = (jnp.sum(m2_c, axis=(0, 1)) +
          jnp.sum(m_c * (mean_c - mean) ** 2, axis=(0, 1)))
    var = jnp.maximum(m2, 0.0) / total                   # biased BN batch var
    inv_std = jax.lax.rsqrt(var + 1e-5)

    # ---- pass 2: masked L2 accumulation ------------------------------------ #
    loss_parts = pl.pallas_call(
        _make_loss_kernel(c_in, c_out, hw, thw, nt_c, needs_mask),
        grid=grid,
        in_specs=[s_spec, t_spec, w_spec, param_spec, param_spec, param_spec],
        out_specs=pl.BlockSpec((1, 1, c_out, 1), lambda ni, sp, j: (ni, sp, 0, 0)),
        out_shape=jax.ShapeDtypeStruct((n, n_sp, c_out, 1), jnp.float32),
        scratch_shapes=[pltpu.VMEM((c_out, thw), jnp.float32)],
        compiler_params=compiler_params,
        cost_estimate=pl.CostEstimate(
            flops=flops_mm + 10 * m * c_out,
            transcendentals=0,
            bytes_accessed=bytes_in),
    )(s3, t3, w2, margin.reshape(c_out, 1), mean.reshape(c_out, 1),
      inv_std.reshape(c_out, 1))

    return jnp.sum(loss_parts) / (m * c_out)


# --------------------------------------------------------------------------- #
# pure-JAX reference (mirrors the PyTorch forward, training-mode BN)
# --------------------------------------------------------------------------- #
def _ofd_reference(fm_s, fm_t, conv_weight):
    t = fm_t.astype(jnp.float32)
    neg = (t < 0.0).astype(jnp.float32)
    margin = (t * neg).sum(axis=(0, 2, 3), keepdims=True) / (
        neg.sum(axis=(0, 2, 3), keepdims=True) + 1e-6)
    t_c = jnp.maximum(t, margin)

    w = conv_weight.astype(jnp.float32)                  # (Cout, Cin, 1, 1)
    y = jnp.einsum("nchw,oc->nohw", fm_s.astype(jnp.float32), w[:, :, 0, 0])
    mean = y.mean(axis=(0, 2, 3), keepdims=True)
    var = ((y - mean) ** 2).mean(axis=(0, 2, 3), keepdims=True)
    y_bn = (y - mean) * jax.lax.rsqrt(var + 1e-5)

    mask = 1.0 - jnp.logical_and(y_bn <= t_c, t_c <= 0.0).astype(jnp.float32)
    return jnp.mean((y_bn - t_c) ** 2 * mask)


# --------------------------------------------------------------------------- #
# self-test
# --------------------------------------------------------------------------- #
if __name__ == "__main__":
    def _kaiming_weight(key, c_out, c_in):
        # Conv2d weight (Cout, Cin, 1, 1), Kaiming normal, mode='fan_out', relu:
        # std = sqrt(2 / fan_out), fan_out = Cout * kh * kw = Cout.
        std = (2.0 / c_out) ** 0.5
        return std * jax.random.normal(key, (c_out, c_in, 1, 1), dtype=jnp.float32)

    def _run_case(name, n, c_in, c_out, h, w, tile_hw=None,
                  stream_dtype=jnp.bfloat16, seed=0):
        ks, kt, kw = jax.random.split(jax.random.PRNGKey(seed), 3)
        fm_s = jax.random.normal(ks, (n, c_in, h, w), dtype=jnp.float32)
        fm_t = jax.random.normal(kt, (n, c_out, h, w), dtype=jnp.float32)
        wgt = _kaiming_weight(kw, c_out, c_in)

        fn = jax.jit(functools.partial(ofd_loss, stream_dtype=stream_dtype,
                                       tile_hw=tile_hw))
        loss = fn(fm_s, fm_t, wgt)
        jax.block_until_ready(loss)

        if stream_dtype == jnp.float32:
            ref = _ofd_reference(fm_s, fm_t, wgt)
        else:
            # Compare against the same bf16-rounded inputs the kernel streams.
            ref = _ofd_reference(fm_s.astype(stream_dtype).astype(jnp.float32),
                                 fm_t.astype(stream_dtype).astype(jnp.float32),
                                 wgt)
        ok = jnp.allclose(loss, ref, rtol=1e-3, atol=1e-5)
        assert bool(ok), (name, float(loss), float(ref))

    # Exact f32 semantics (matches the PyTorch forward bit-for-bit-ish).
    _run_case("base_f32", 2, 4, 8, 16, 16, stream_dtype=jnp.float32)
    # Default bf16 streaming path.
    _run_case("base_bf16", 2, 4, 8, 16, 16)
    # Multi-tile + dual spatial chunk (n_sp=2) + MXU conv path, batch 1.
    _run_case("tiled_chunks", 1, 16, 32, 8, 64, tile_hw=128)
    # Ragged last tile + ragged chunk (masking + traced first-tile count).
    _run_case("ragged", 2, 4, 8, 8, 25, tile_hw=128)

    print("KERNEL_OK")
</pallas_src>

<mosaic_0001>
module attributes {stable_mosaic.version = 11 : i64} {
  func.func @kernel(%arg0: i32, %arg1: i32, %arg2: i32, %arg3: memref<1x4x256xf32, #tpu.memory_space<vmem>>, %arg4: memref<1x8x256xf32, #tpu.memory_space<vmem>>, %arg5: memref<8x4xf32, #tpu.memory_space<vmem>>, %arg6: memref<1x1x8x5xf32, #tpu.memory_space<vmem>>) attributes {dimension_semantics = [#tpu.dimension_semantics<parallel>, #tpu.dimension_semantics<parallel>, #tpu.dimension_semantics<arbitrary>], iteration_bounds = array<i64: 2, 1, 1>, scalar_prefetch = 0 : i64, scratch_operands = 0 : i64, tpu.core_type = #tpu.core_type<tc>, window_params = [{transform_indices = @transform_0, window_bounds = array<i64: 1, 4, 256>}, {transform_indices = @transform_1, window_bounds = array<i64: 1, 8, 256>}, {pipeline_mode = #tpu.pipeline_mode<synchronous>, transform_indices = @transform_2, window_bounds = array<i64: 8, 4>}, {transform_indices = @transform_3, window_bounds = array<i64: 1, 1, 8, 5>}]} {
    %c0 = arith.constant 0 : index
    %c0_0 = arith.constant 0 : index
    %c0_1 = arith.constant 0 : index
    %0 = vector.load %arg3[%c0, %c0_0, %c0_1] : memref<1x4x256xf32, #tpu.memory_space<vmem>>, vector<1x4x256xf32>
    %1 = vector.shape_cast %0 : vector<1x4x256xf32> to vector<4x256xf32>
    %c0_2 = arith.constant 0 : index
    %c0_3 = arith.constant 0 : index
    %c0_4 = arith.constant 0 : index
    %2 = vector.load %arg4[%c0_2, %c0_3, %c0_4] : memref<1x8x256xf32, #tpu.memory_space<vmem>>, vector<1x8x256xf32>
    %3 = vector.shape_cast %2 : vector<1x8x256xf32> to vector<8x256xf32>
    %c0_5 = arith.constant 0 : index
    %c0_6 = arith.constant 0 : index
    %4 = vector.load %arg5[%c0_5, %c0_6] : memref<8x4xf32, #tpu.memory_space<vmem>>, vector<8x4xf32>
    %5 = vector.extract_strided_slice %4 {offsets = [0, 0], sizes = [8, 1], strides = [1, 1]} : vector<8x4xf32> to vector<8x1xf32>
    %6 = vector.extract_strided_slice %1 {offsets = [0, 0], sizes = [1, 256], strides = [1, 1]} : vector<4x256xf32> to vector<1x256xf32>
    %7 = vector.broadcast %5 : vector<8x1xf32> to vector<8x256xf32>
    %8 = vector.broadcast %6 : vector<1x256xf32> to vector<8x256xf32>
    %9 = arith.mulf %7, %8 : vector<8x256xf32>
    %10 = vector.extract_strided_slice %4 {offsets = [0, 1], sizes = [8, 1], strides = [1, 1]} : vector<8x4xf32> to vector<8x1xf32>
    %11 = vector.extract_strided_slice %1 {offsets = [1, 0], sizes = [1, 256], strides = [1, 1]} : vector<4x256xf32> to vector<1x256xf32>
    %12 = vector.broadcast %10 : vector<8x1xf32> to vector<8x256xf32>
    %13 = vector.broadcast %11 : vector<1x256xf32> to vector<8x256xf32>
    %14 = arith.mulf %12, %13 : vector<8x256xf32>
    %15 = arith.addf %9, %14 : vector<8x256xf32>
    %16 = vector.extract_strided_slice %4 {offsets = [0, 2], sizes = [8, 1], strides = [1, 1]} : vector<8x4xf32> to vector<8x1xf32>
    %17 = vector.extract_strided_slice %1 {offsets = [2, 0], sizes = [1, 256], strides = [1, 1]} : vector<4x256xf32> to vector<1x256xf32>
    %18 = vector.broadcast %16 : vector<8x1xf32> to vector<8x256xf32>
    %19 = vector.broadcast %17 : vector<1x256xf32> to vector<8x256xf32>
    %20 = arith.mulf %18, %19 : vector<8x256xf32>
    %21 = arith.addf %15, %20 : vector<8x256xf32>
    %22 = vector.extract_strided_slice %4 {offsets = [0, 3], sizes = [8, 1], strides = [1, 1]} : vector<8x4xf32> to vector<8x1xf32>
    %23 = vector.extract_strided_slice %1 {offsets = [3, 0], sizes = [1, 256], strides = [1, 1]} : vector<4x256xf32> to vector<1x256xf32>
    %24 = vector.broadcast %22 : vector<8x1xf32> to vector<8x256xf32>
    %25 = vector.broadcast %23 : vector<1x256xf32> to vector<8x256xf32>
    %26 = arith.mulf %24, %25 : vector<8x256xf32>
    %27 = arith.addf %21, %26 : vector<8x256xf32>
    %cst = arith.constant 0.000000e+00 : f32
    %28 = vector.broadcast %cst : f32 to vector<8x256xf32>
    %29 = arith.cmpf olt, %3, %28 : vector<8x256xf32>
    %cst_7 = arith.constant 0.000000e+00 : f32
    %30 = vector.broadcast %cst_7 : f32 to vector<8x256xf32>
    %31 = arith.select %29, %3, %30 : vector<8x256xi1>, vector<8x256xf32>
    %c0_i32 = arith.constant 0 : i32
    %32 = arith.cmpi eq, %arg2, %c0_i32 : i32
    %33 = arith.extui %32 : i1 to i32
    %c0_i32_8 = arith.constant 0 : i32
    %34 = arith.cmpi ne, %33, %c0_i32_8 : i32
    scf.if %34 {
      %cst_45 = arith.constant 0.000000e+00 : f32
      %74 = vector.broadcast %cst_45 : f32 to vector<1x1x8x5xf32>
      %c0_46 = arith.constant 0 : index
      %c0_47 = arith.constant 0 : index
      %c0_48 = arith.constant 0 : index
      %c0_49 = arith.constant 0 : index
      %75 = vector.load %arg6[%c0_46, %c0_47, %c0_48, %c0_49] : memref<1x1x8x5xf32, #tpu.memory_space<vmem>>, vector<1x1x8x5xf32>
      tpu.vector_store %arg6[%c0_46, %c0_47, %c0_48, %c0_49], %74 {strides = array<i32>} : memref<1x1x8x5xf32, #tpu.memory_space<vmem>>, vector<1x1x8x5xf32>,
      %cst_50 = arith.constant dense<0.000000e+00> : vector<8xf32>
      %76 = vector.multi_reduction <add>, %27, %cst_50 [1] : vector<8x256xf32> to vector<8xf32>
      %77 = vector.shape_cast %76 : vector<8xf32> to vector<8x1xf32>
      %cst_51 = arith.constant 2.560000e+02 : f32
      %78 = vector.broadcast %cst_51 : f32 to vector<8x1xf32>
      %79 = arith.divf %77, %78 : vector<8x1xf32>
      %c0_52 = arith.constant 0 : index
      %c0_53 = arith.constant 0 : index
      %c0_54 = arith.constant 0 : index
      %c4_55 = arith.constant 4 : index
      %80 = vector.load %arg6[%c0_52, %c0_53, %c0_54, %c4_55] : memref<1x1x8x5xf32, #tpu.memory_space<vmem>>, vector<1x1x8x1xf32>
      %81 = vector.shape_cast %80 : vector<1x1x8x1xf32> to vector<8x1xf32>
      %82 = vector.shape_cast %79 : vector<8x1xf32> to vector<1x1x8x1xf32>
      tpu.vector_store %arg6[%c0_52, %c0_53, %c0_54, %c4_55], %82 {strides = array<i32>} : memref<1x1x8x5xf32, #tpu.memory_space<vmem>>, vector<1x1x8x1xf32>,
    } else {
    }
    %c0_9 = arith.constant 0 : index
    %c0_10 = arith.constant 0 : index
    %c0_11 = arith.constant 0 : index
    %c4 = arith.constant 4 : index
    %35 = vector.load %arg6[%c0_9, %c0_10, %c0_11, %c4] : memref<1x1x8x5xf32, #tpu.memory_space<vmem>>, vector<1x1x8x1xf32>
    %36 = vector.shape_cast %35 : vector<1x1x8x1xf32> to vector<8x1xf32>
    %37 = vector.broadcast %36 : vector<8x1xf32> to vector<8x256xf32>
    %38 = arith.subf %27, %37 : vector<8x256xf32>
    %c0_12 = arith.constant 0 : index
    %c0_13 = arith.constant 0 : index
    %c0_14 = arith.constant 0 : index
    %c0_15 = arith.constant 0 : index
    %39 = vector.load %arg6[%c0_12, %c0_13, %c0_14, %c0_15] : memref<1x1x8x5xf32, #tpu.memory_space<vmem>>, vector<1x1x8x1xf32>
    %40 = vector.shape_cast %39 : vector<1x1x8x1xf32> to vector<8x1xf32>
    %cst_16 = arith.constant dense<0.000000e+00> : vector<8xf32>
    %41 = vector.multi_reduction <add>, %31, %cst_16 [1] : vector<8x256xf32> to vector<8xf32>
    %42 = vector.shape_cast %41 : vector<8xf32> to vector<8x1xf32>
    %43 = arith.addf %40, %42 : vector<8x1xf32>
    %c0_17 = arith.constant 0 : index
    %c0_18 = arith.constant 0 : index
    %c0_19 = arith.constant 0 : index
    %c0_20 = arith.constant 0 : index
    %44 = vector.load %arg6[%c0_17, %c0_18, %c0_19, %c0_20] : memref<1x1x8x5xf32, #tpu.memory_space<vmem>>, vector<1x1x8x1xf32>
    %45 = vector.shape_cast %44 : vector<1x1x8x1xf32> to vector<8x1xf32>
    %46 = vector.shape_cast %43 : vector<8x1xf32> to vector<1x1x8x1xf32>
    tpu.vector_store %arg6[%c0_17, %c0_18, %c0_19, %c0_20], %46 {strides = array<i32>} : memref<1x1x8x5xf32, #tpu.memory_space<vmem>>, vector<1x1x8x1xf32>,
    %c0_21 = arith.constant 0 : index
    %c0_22 = arith.constant 0 : index
    %c0_23 = arith.constant 0 : index
    %c1 = arith.constant 1 : index
    %47 = vector.load %arg6[%c0_21, %c0_22, %c0_23, %c1] : memref<1x1x8x5xf32, #tpu.memory_space<vmem>>, vector<1x1x8x1xf32>
    %48 = vector.shape_cast %47 : vector<1x1x8x1xf32> to vector<8x1xf32>
    %49 = arith.extui %29 : vector<8x256xi1> to vector<8x256xi32>
    %50 = arith.sitofp %49 : vector<8x256xi32> to vector<8x256xf32>
    %cst_24 = arith.constant dense<0.000000e+00> : vector<8xf32>
    %51 = vector.multi_reduction <add>, %50, %cst_24 [1] : vector<8x256xf32> to vector<8xf32>
    %52 = vector.shape_cast %51 : vector<8xf32> to vector<8x1xf32>
    %53 = arith.addf %48, %52 : vector<8x1xf32>
    %c0_25 = arith.constant 0 : index
    %c0_26 = arith.constant 0 : index
    %c0_27 = arith.constant 0 : index
    %c1_28 = arith.constant 1 : index
    %54 = vector.load %arg6[%c0_25, %c0_26, %c0_27, %c1_28] : memref<1x1x8x5xf32, #tpu.memory_space<vmem>>, vector<1x1x8x1xf32>
    %55 = vector.shape_cast %54 : vector<1x1x8x1xf32> to vector<8x1xf32>
    %56 = vector.shape_cast %53 : vector<8x1xf32> to vector<1x1x8x1xf32>
    tpu.vector_store %arg6[%c0_25, %c0_26, %c0_27, %c1_28], %56 {strides = array<i32>} : memref<1x1x8x5xf32, #tpu.memory_space<vmem>>, vector<1x1x8x1xf32>,
    %c0_29 = arith.constant 0 : index
    %c0_30 = arith.constant 0 : index
    %c0_31 = arith.constant 0 : index
    %c2 = arith.constant 2 : index
    %57 = vector.load %arg6[%c0_29, %c0_30, %c0_31, %c2] : memref<1x1x8x5xf32, #tpu.memory_space<vmem>>, vector<1x1x8x1xf32>
    %58 = vector.shape_cast %57 : vector<1x1x8x1xf32> to vector<8x1xf32>
    %cst_32 = arith.constant dense<0.000000e+00> : vector<8xf32>
    %59 = vector.multi_reduction <add>, %38, %cst_32 [1] : vector<8x256xf32> to vector<8xf32>
    %60 = vector.shape_cast %59 : vector<8xf32> to vector<8x1xf32>
    %61 = arith.addf %58, %60 : vector<8x1xf32>
    %c0_33 = arith.constant 0 : index
    %c0_34 = arith.constant 0 : index
    %c0_35 = arith.constant 0 : index
    %c2_36 = arith.constant 2 : index
    %62 = vector.load %arg6[%c0_33, %c0_34, %c0_35, %c2_36] : memref<1x1x8x5xf32, #tpu.memory_space<vmem>>, vector<1x1x8x1xf32>
    %63 = vector.shape_cast %62 : vector<1x1x8x1xf32> to vector<8x1xf32>
    %64 = vector.shape_cast %61 : vector<8x1xf32> to vector<1x1x8x1xf32>
    tpu.vector_store %arg6[%c0_33, %c0_34, %c0_35, %c2_36], %64 {strides = array<i32>} : memref<1x1x8x5xf32, #tpu.memory_space<vmem>>, vector<1x1x8x1xf32>,
    %c0_37 = arith.constant 0 : index
    %c0_38 = arith.constant 0 : index
    %c0_39 = arith.constant 0 : index
    %c3 = arith.constant 3 : index
    %65 = vector.load %arg6[%c0_37, %c0_38, %c0_39, %c3] : memref<1x1x8x5xf32, #tpu.memory_space<vmem>>, vector<1x1x8x1xf32>
    %66 = vector.shape_cast %65 : vector<1x1x8x1xf32> to vector<8x1xf32>
    %67 = arith.mulf %38, %38 : vector<8x256xf32>
    %cst_40 = arith.constant dense<0.000000e+00> : vector<8xf32>
    %68 = vector.multi_reduction <add>, %67, %cst_40 [1] : vector<8x256xf32> to vector<8xf32>
    %69 = vector.shape_cast %68 : vector<8xf32> to vector<8x1xf32>
    %70 = arith.addf %66, %69 : vector<8x1xf32>
    %c0_41 = arith.constant 0 : index
    %c0_42 = arith.constant 0 : index
    %c0_43 = arith.constant 0 : index
    %c3_44 = arith.constant 3 : index
    %71 = vector.load %arg6[%c0_41, %c0_42, %c0_43, %c3_44] : memref<1x1x8x5xf32, #tpu.memory_space<vmem>>, vector<1x1x8x1xf32>
    %72 = vector.shape_cast %71 : vector<1x1x8x1xf32> to vector<8x1xf32>
    %73 = vector.shape_cast %70 : vector<8x1xf32> to vector<1x1x8x1xf32>
    tpu.vector_store %arg6[%c0_41, %c0_42, %c0_43, %c3_44], %73 {strides = array<i32>} : memref<1x1x8x5xf32, #tpu.memory_space<vmem>>, vector<1x1x8x1xf32>,
    return
  }
  func.func @transform_0(%arg0: i32, %arg1: i32, %arg2: i32) -> (i32, i32, i32) {
    %c1_i32 = arith.constant 1 : i32
    %0 = arith.muli %arg1, %c1_i32 : i32
    %1 = arith.addi %0, %arg2 : i32
    %c0_i32 = arith.constant 0 : i32
    %c0_i32_0 = arith.constant 0 : i32
    return %arg0, %c0_i32, %1 : i32, i32, i32
  }
  func.func @transform_1(%arg0: i32, %arg1: i32, %arg2: i32) -> (i32, i32, i32) {
    %c1_i32 = arith.constant 1 : i32
    %0 = arith.muli %arg1, %c1_i32 : i32
    %1 = arith.addi %0, %arg2 : i32
    %c0_i32 = arith.constant 0 : i32
    %c0_i32_0 = arith.constant 0 : i32
    return %arg0, %c0_i32, %1 : i32, i32, i32
  }
  func.func @transform_2(%arg0: i32, %arg1: i32, %arg2: i32) -> (i32, i32) {
    %c0_i32 = arith.constant 0 : i32
    %c0_i32_0 = arith.constant 0 : i32
    %c0_i32_1 = arith.constant 0 : i32
    return %c0_i32, %c0_i32_0 : i32, i32
  }
  func.func @transform_3(%arg0: i32, %arg1: i32, %arg2: i32) -> (i32, i32, i32, i32) {
    %c0_i32 = arith.constant 0 : i32
    %c0_i32_0 = arith.constant 0 : i32
    %c0_i32_1 = arith.constant 0 : i32
    return %arg0, %arg1, %c0_i32, %c0_i32_0 : i32, i32, i32, i32
  }
}

module attributes {stable_mosaic.version = 11 : i64} {
  func.func @kernel(%arg0: i32, %arg1: i32, %arg2: i32, %arg3: memref<1x4x256xf32, #tpu.memory_space<vmem>>, %arg4: memref<1x8x256xf32, #tpu.memory_space<vmem>>, %arg5: memref<8x4xf32, #tpu.memory_space<vmem>>, %arg6: memref<8x1xf32, #tpu.memory_space<vmem>>, %arg7: memref<8x1xf32, #tpu.memory_space<vmem>>, %arg8: memref<8x1xf32, #tpu.memory_space<vmem>>, %arg9: memref<1x1x8x1xf32, #tpu.memory_space<vmem>>, %arg10: memref<8x256xf32, #tpu.memory_space<vmem>>) attributes {dimension_semantics = [#tpu.dimension_semantics<parallel>, #tpu.dimension_semantics<parallel>, #tpu.dimension_semantics<arbitrary>], iteration_bounds = array<i64: 2, 1, 1>, scalar_prefetch = 0 : i64, scratch_operands = 1 : i64, tpu.core_type = #tpu.core_type<tc>, window_params = [{transform_indices = @transform_0, window_bounds = array<i64: 1, 4, 256>}, {transform_indices = @transform_1, window_bounds = array<i64: 1, 8, 256>}, {pipeline_mode = #tpu.pipeline_mode<synchronous>, transform_indices = @transform_2, window_bounds = array<i64: 8, 4>}, {pipeline_mode = #tpu.pipeline_mode<synchronous>, transform_indices = @transform_3, window_bounds = array<i64: 8, 1>}, {pipeline_mode = #tpu.pipeline_mode<synchronous>, transform_indices = @transform_4, window_bounds = array<i64: 8, 1>}, {pipeline_mode = #tpu.pipeline_mode<synchronous>, transform_indices = @transform_5, window_bounds = array<i64: 8, 1>}, {transform_indices = @transform_6, window_bounds = array<i64: 1, 1, 8, 1>}]} {
    %c0_i32 = arith.constant 0 : i32
    %0 = arith.cmpi eq, %arg2, %c0_i32 : i32
    %1 = arith.extui %0 : i1 to i32
    %c0_i32_0 = arith.constant 0 : i32
    %2 = arith.cmpi ne, %1, %c0_i32_0 : i32
    scf.if %2 {
      %cst_21 = arith.constant 0.000000e+00 : f32
      %54 = vector.broadcast %cst_21 : f32 to vector<8x256xf32>
      %c0_22 = arith.constant 0 : index
      %c0_23 = arith.constant 0 : index
      %55 = vector.load %arg10[%c0_22, %c0_23] : memref<8x256xf32, #tpu.memory_space<vmem>>, vector<8x256xf32>
      tpu.vector_store %arg10[%c0_22, %c0_23], %54 {strides = array<i32>} : memref<8x256xf32, #tpu.memory_space<vmem>>, vector<8x256xf32>,
    } else {
    }
    %c0 = arith.constant 0 : index
    %c0_1 = arith.constant 0 : index
    %c0_2 = arith.constant 0 : index
    %3 = vector.load %arg3[%c0, %c0_1, %c0_2] : memref<1x4x256xf32, #tpu.memory_space<vmem>>, vector<1x4x256xf32>
    %4 = vector.shape_cast %3 : vector<1x4x256xf32> to vector<4x256xf32>
    %c0_3 = arith.constant 0 : index
    %c0_4 = arith.constant 0 : index
    %c0_5 = arith.constant 0 : index
    %5 = vector.load %arg4[%c0_3, %c0_4, %c0_5] : memref<1x8x256xf32, #tpu.memory_space<vmem>>, vector<1x8x256xf32>
    %6 = vector.shape_cast %5 : vector<1x8x256xf32> to vector<8x256xf32>
    %c0_6 = arith.constant 0 : index
    %c0_7 = arith.constant 0 : index
    %7 = vector.load %arg5[%c0_6, %c0_7] : memref<8x4xf32, #tpu.memory_space<vmem>>, vector<8x4xf32>
    %c0_8 = arith.constant 0 : index
    %c0_9 = arith.constant 0 : index
    %8 = vector.load %arg6[%c0_8, %c0_9] : memref<8x1xf32, #tpu.memory_space<vmem>>, vector<8x1xf32>
    %9 = vector.broadcast %8 : vector<8x1xf32> to vector<8x256xf32>
    %10 = arith.maximumf %6, %9 : vector<8x256xf32>
    %11 = vector.extract_strided_slice %7 {offsets = [0, 0], sizes = [8, 1], strides = [1, 1]} : vector<8x4xf32> to vector<8x1xf32>
    %12 = vector.extract_strided_slice %4 {offsets = [0, 0], sizes = [1, 256], strides = [1, 1]} : vector<4x256xf32> to vector<1x256xf32>
    %13 = vector.broadcast %11 : vector<8x1xf32> to vector<8x256xf32>
    %14 = vector.broadcast %12 : vector<1x256xf32> to vector<8x256xf32>
    %15 = arith.mulf %13, %14 : vector<8x256xf32>
    %16 = vector.extract_strided_slice %7 {offsets = [0, 1], sizes = [8, 1], strides = [1, 1]} : vector<8x4xf32> to vector<8x1xf32>
    %17 = vector.extract_strided_slice %4 {offsets = [1, 0], sizes = [1, 256], strides = [1, 1]} : vector<4x256xf32> to vector<1x256xf32>
    %18 = vector.broadcast %16 : vector<8x1xf32> to vector<8x256xf32>
    %19 = vector.broadcast %17 : vector<1x256xf32> to vector<8x256xf32>
    %20 = arith.mulf %18, %19 : vector<8x256xf32>
    %21 = arith.addf %15, %20 : vector<8x256xf32>
    %22 = vector.extract_strided_slice %7 {offsets = [0, 2], sizes = [8, 1], strides = [1, 1]} : vector<8x4xf32> to vector<8x1xf32>
    %23 = vector.extract_strided_slice %4 {offsets = [2, 0], sizes = [1, 256], strides = [1, 1]} : vector<4x256xf32> to vector<1x256xf32>
    %24 = vector.broadcast %22 : vector<8x1xf32> to vector<8x256xf32>
    %25 = vector.broadcast %23 : vector<1x256xf32> to vector<8x256xf32>
    %26 = arith.mulf %24, %25 : vector<8x256xf32>
    %27 = arith.addf %21, %26 : vector<8x256xf32>
    %28 = vector.extract_strided_slice %7 {offsets = [0, 3], sizes = [8, 1], strides = [1, 1]} : vector<8x4xf32> to vector<8x1xf32>
    %29 = vector.extract_strided_slice %4 {offsets = [3, 0], sizes = [1, 256], strides = [1, 1]} : vector<4x256xf32> to vector<1x256xf32>
    %30 = vector.broadcast %28 : vector<8x1xf32> to vector<8x256xf32>
    %31 = vector.broadcast %29 : vector<1x256xf32> to vector<8x256xf32>
    %32 = arith.mulf %30, %31 : vector<8x256xf32>
    %33 = arith.addf %27, %32 : vector<8x256xf32>
    %c0_10 = arith.constant 0 : index
    %c0_11 = arith.constant 0 : index
    %34 = vector.load %arg7[%c0_10, %c0_11] : memref<8x1xf32, #tpu.memory_space<vmem>>, vector<8x1xf32>
    %35 = vector.broadcast %34 : vector<8x1xf32> to vector<8x256xf32>
    %36 = arith.subf %33, %35 : vector<8x256xf32>
    %c0_12 = arith.constant 0 : index
    %c0_13 = arith.constant 0 : index
    %37 = vector.load %arg8[%c0_12, %c0_13] : memref<8x1xf32, #tpu.memory_space<vmem>>, vector<8x1xf32>
    %38 = vector.broadcast %37 : vector<8x1xf32> to vector<8x256xf32>
    %39 = arith.mulf %36, %38 : vector<8x256xf32>
    %40 = arith.subf %39, %10 : vector<8x256xf32>
    %41 = arith.cmpf ogt, %39, %10 : vector<8x256xf32>
    %cst = arith.constant 0.000000e+00 : f32
    %42 = vector.broadcast %cst : f32 to vector<8x256xf32>
    %43 = arith.cmpf ogt, %10, %42 : vector<8x256xf32>
    %44 = arith.ori %41, %43 : vector<8x256xi1>
    %c0_14 = arith.constant 0 : index
    %c0_15 = arith.constant 0 : index
    %45 = vector.load %arg10[%c0_14, %c0_15] : memref<8x256xf32, #tpu.memory_space<vmem>>, vector<8x256xf32>
    %46 = arith.mulf %40, %40 : vector<8x256xf32>
    %cst_16 = arith.constant 0.000000e+00 : f32
    %47 = vector.broadcast %cst_16 : f32 to vector<8x256xf32>
    %48 = arith.select %44, %46, %47 : vector<8x256xi1>, vector<8x256xf32>
    %49 = arith.addf %45, %48 : vector<8x256xf32>
    %c0_17 = arith.constant 0 : index
    %c0_18 = arith.constant 0 : index
    %50 = vector.load %arg10[%c0_17, %c0_18] : memref<8x256xf32, #tpu.memory_space<vmem>>, vector<8x256xf32>
    tpu.vector_store %arg10[%c0_17, %c0_18], %49 {strides = array<i32>} : memref<8x256xf32, #tpu.memory_space<vmem>>, vector<8x256xf32>,
    %c0_i32_19 = arith.constant 0 : i32
    %51 = arith.cmpi eq, %arg2, %c0_i32_19 : i32
    %52 = arith.extui %51 : i1 to i32
    %c0_i32_20 = arith.constant 0 : i32
    %53 = arith.cmpi ne, %52, %c0_i32_20 : i32
    scf.if %53 {
      %c0_21 = arith.constant 0 : index
      %c0_22 = arith.constant 0 : index
      %54 = vector.load %arg10[%c0_21, %c0_22] : memref<8x256xf32, #tpu.memory_space<vmem>>, vector<8x256xf32>
      %cst_23 = arith.constant dense<0.000000e+00> : vector<8xf32>
      %55 = vector.multi_reduction <add>, %54, %cst_23 [1] : vector<8x256xf32> to vector<8xf32>
      %56 = vector.shape_cast %55 : vector<8xf32> to vector<8x1xf32>
      %57 = vector.shape_cast %56 : vector<8x1xf32> to vector<1x1x8x1xf32>
      %c0_24 = arith.constant 0 : index
      %c0_25 = arith.constant 0 : index
      %c0_26 = arith.constant 0 : index
      %c0_27 = arith.constant 0 : index
      %58 = vector.load %arg9[%c0_24, %c0_25, %c0_26, %c0_27] : memref<1x1x8x1xf32, #tpu.memory_space<vmem>>, vector<1x1x8x1xf32>
      tpu.vector_store %arg9[%c0_24, %c0_25, %c0_26, %c0_27], %57 {strides = array<i32>} : memref<1x1x8x1xf32, #tpu.memory_space<vmem>>, vector<1x1x8x1xf32>,
    } else {
    }
    return
  }
  func.func @transform_0(%arg0: i32, %arg1: i32, %arg2: i32) -> (i32, i32, i32) {
    %c1_i32 = arith.constant 1 : i32
    %0 = arith.muli %arg1, %c1_i32 : i32
    %1 = arith.addi %0, %arg2 : i32
    %c0_i32 = arith.constant 0 : i32
    %c0_i32_0 = arith.constant 0 : i32
    return %arg0, %c0_i32, %1 : i32, i32, i32
  }
  func.func @transform_1(%arg0: i32, %arg1: i32, %arg2: i32) -> (i32, i32, i32) {
    %c1_i32 = arith.constant 1 : i32
    %0 = arith.muli %arg1, %c1_i32 : i32
    %1 = arith.addi %0, %arg2 : i32
    %c0_i32 = arith.constant 0 : i32
    %c0_i32_0 = arith.constant 0 : i32
    return %arg0, %c0_i32, %1 : i32, i32, i32
  }
  func.func @transform_2(%arg0: i32, %arg1: i32, %arg2: i32) -> (i32, i32) {
    %c0_i32 = arith.constant 0 : i32
    %c0_i32_0 = arith.constant 0 : i32
    %c0_i32_1 = arith.constant 0 : i32
    return %c0_i32, %c0_i32_0 : i32, i32
  }
  func.func @transform_3(%arg0: i32, %arg1: i32, %arg2: i32) -> (i32, i32) {
    %c0_i32 = arith.constant 0 : i32
    %c0_i32_0 = arith.constant 0 : i32
    %c0_i32_1 = arith.constant 0 : i32
    return %c0_i32, %c0_i32_0 : i32, i32
  }
  func.func @transform_4(%arg0: i32, %arg1: i32, %arg2: i32) -> (i32, i32) {
    %c0_i32 = arith.constant 0 : i32
    %c0_i32_0 = arith.constant 0 : i32
    %c0_i32_1 = arith.constant 0 : i32
    return %c0_i32, %c0_i32_0 : i32, i32
  }
  func.func @transform_5(%arg0: i32, %arg1: i32, %arg2: i32) -> (i32, i32) {
    %c0_i32 = arith.constant 0 : i32
    %c0_i32_0 = arith.constant 0 : i32
    %c0_i32_1 = arith.constant 0 : i32
    return %c0_i32, %c0_i32_0 : i32, i32
  }
  func.func @transform_6(%arg0: i32, %arg1: i32, %arg2: i32) -> (i32, i32, i32, i32) {
    %c0_i32 = arith.constant 0 : i32
    %c0_i32_0 = arith.constant 0 : i32
    %c0_i32_1 = arith.constant 0 : i32
    return %arg0, %arg1, %c0_i32, %c0_i32_0 : i32, i32, i32, i32
  }
}

</mosaic_0001>

<llo_original>
// kernel: ofd_loss.2
$region0: #{ofd_loss.2}
  #allocation0 [shape = 'u32[]', space=smem, size = 0x4, offset = 0x4, fixed_abs, tag = 'smem constant byte address 0x4 - core index']
  #allocation1 [shape = 'u32[144,128]{1,0:T(1,128)}', space=vmem, size = 0x12000, scoped, tag = 'internal scratch']
  %s0 = inlined_call_operand.vmem [shape: f32[2,4,256], index: 0, kind: input, shape index: {}]
  %s1 = inlined_call_operand.vmem [shape: f32[2,8,256], index: 1, kind: input, shape index: {}]
  %s2 = inlined_call_operand.vmem [shape: f32[8,4], index: 2, kind: input, shape index: {}]
  %s3 = inlined_call_operand.vmem [shape: f32[2,1,8,5], index: 3, kind: output, shape index: {}]
  %s4 = sld [smem:[#allocation0]]
  $region49: #{ofd_loss.2} parent=0
    _
  %s6 = ssub.s32 1, %s4
  %s7 = scalar_select 0, %s6, %s4
  loop: start=0, step=1, limit=4
  $region2: #{ofd_loss.2} parent=0 // loop_pre_header
    _
  $region3: #{ofd_loss.2} parent=0 // loop_header
    %s9 = sphi 0, %s13
    %p10 = scmp.ge.s32.totalorder %s9, 4
    %s16 = sphi 0, %s35
    %s17 = sphi 0, %s31
    %s18 = sphi 0, %s27
    %s19 = sphi 0, %s16
    %s20 = sphi 0, %s17
    %s21 = sphi 0, %s18
    %s22 = sphi 0, %s19
    %s23 = sphi 0, %s20
    %s24 = sphi 0, %s21
    %s42 = sphi 0, %s44
    %s45 = sphi 0, %s42
    %s46 = sphi 0, %s45
    %s62 = sphi 0, %s46
    %s72 = sphi 0, %s74
    %s75 = sphi 0, %s72
    %s76 = sphi 0, %s75
    %s92 = sphi 0, %s76
    %s96 = sphi 0, %s96
    %s98 = sphi 0, %s96
    %s99 = sphi 0, %s98
    %s113 = sphi 0, %s99
    %s121 = sphi 0, %s123
    %s124 = sphi 0, %s121
    %s125 = sphi 0, %s124
    %s141 = sphi 0, %s125
  $region4: #{ofd_loss.2} parent=0 // loop_header_branch
    %12 = sbr.rel (%p10) target = $region8
  $region5: #{ofd_loss.2} parent=0 // loop_body
    %s14 = ssub.s32 %s9, 1
    %s15 = ssub.s32 %s9, 2
    %s25 = sadd.s32 1, %s18
    %p26 = scmp.ge.s32.totalorder %s25, 1
    %s27 = scalar_select %p26, 0, %s25
    %s28 = sadd.s32 1, %s17
    %s29 = scalar_select %p26, %s28, %s17
    %p30 = scmp.ge.s32.totalorder %s29, 1
    %s31 = scalar_select %p30, 0, %s29
    %s32 = sadd.s32 1, %s16
    %s33 = scalar_select %p30, %s32, %s16
    %p34 = scmp.ge.s32.totalorder %s33, 2
    %s35 = scalar_select %p34, 0, %s33
    %s36 = sadd.s32 %s17, %s18
    %s37 = sadd.s32 %s31, %s27
    %s38 = ssub.s32 %s16, %s35
    %s39 = ssub.s32 %s36, %s37
    %s40 = sor.u32 %s38, %s39
    %p41 = scmp.eq.s32.totalorder %s40, 0
    %s43 = sadd.s32 %s42, 1
    %s44 = scalar_select %p41, %s42, %s43
    %p47 = pneg %p41
    %p48 = scmp.eq.s32.totalorder %s9, 1
    %p49 = por %p47, %p48
    %p50 = scmp.ne.s32.totalorder %s42, %s45
    %p51 = scmp.eq.s32.totalorder %s9, 0
    %p52 = por %p50, %p51
    %p53 = scmp.ne.s32.totalorder %s42, %s45
    %p54 = scmp.eq.s32.totalorder %s14, 1
    %p55 = por %p53, %p54
    %p56 = scmp.ne.s32.totalorder %s45, %s46
    %p57 = scmp.eq.s32.totalorder %s14, 0
    %p58 = por %p56, %p57
    %p59 = scmp.ne.s32.totalorder %s45, %s46
    %p60 = scmp.eq.s32.totalorder %s15, 1
    %p61 = por %p59, %p60
    %p63 = scmp.ne.s32.totalorder %s46, %s62
    %p64 = scmp.eq.s32.totalorder %s15, 0
    %p65 = por %p63, %p64
    %s66 = sadd.s32 %s17, %s18
    %s67 = sadd.s32 %s31, %s27
    %s68 = ssub.s32 %s16, %s35
    %s69 = ssub.s32 %s66, %s67
    %s70 = sor.u32 %s68, %s69
    %p71 = scmp.eq.s32.totalorder %s70, 0
    %s73 = sadd.s32 %s72, 1
    %s74 = scalar_select %p71, %s72, %s73
    %p77 = pneg %p71
    %p78 = scmp.eq.s32.totalorder %s9, 1
    %p79 = por %p77, %p78
    %p80 = scmp.ne.s32.totalorder %s72, %s75
    %p81 = scmp.eq.s32.totalorder %s9, 0
    %p82 = por %p80, %p81
    %p83 = scmp.ne.s32.totalorder %s72, %s75
    %p84 = scmp.eq.s32.totalorder %s14, 1
    %p85 = por %p83, %p84
    %p86 = scmp.ne.s32.totalorder %s75, %s76
    %p87 = scmp.eq.s32.totalorder %s14, 0
    %p88 = por %p86, %p87
    %p89 = scmp.ne.s32.totalorder %s75, %s76
    %p90 = scmp.eq.s32.totalorder %s15, 1
    %p91 = por %p89, %p90
    %p93 = scmp.ne.s32.totalorder %s76, %s92
    %p94 = scmp.eq.s32.totalorder %s15, 0
    %p95 = por %p93, %p94
    %s97 = sadd.s32 %s96, 1
    %p100 = scmp.eq.s32.totalorder %s9, 1
    %p101 = scmp.ne.s32.totalorder %s96, %s98
    %p102 = scmp.eq.s32.totalorder %s9, 0
    %p103 = por %p101, %p102
    %p104 = scmp.ne.s32.totalorder %s96, %s98
    %p105 = scmp.eq.s32.totalorder %s14, 1
    %p106 = por %p104, %p105
    %p107 = scmp.ne.s32.totalorder %s98, %s99
    %p108 = scmp.eq.s32.totalorder %s14, 0
    %p109 = por %p107, %p108
    %p110 = scmp.ne.s32.totalorder %s98, %s99
    %p111 = scmp.eq.s32.totalorder %s15, 1
    %p112 = por %p110, %p111
    %p114 = scmp.ne.s32.totalorder %s99, %s113
    %p115 = scmp.eq.s32.totalorder %s15, 0
    %p116 = por %p114, %p115
    %s117 = ssub.s32 %s16, %s35
    %s118 = ssub.s32 %s17, %s31
    %s119 = sor.u32 %s117, %s118
    %p120 = scmp.eq.s32.totalorder %s119, 0
    %s122 = sadd.s32 %s121, 1
    %s123 = scalar_select %p120, %s121, %s122
    %p126 = pneg %p120
    %p127 = scmp.eq.s32.totalorder %s9, 1
    %p128 = por %p126, %p127
    %p129 = scmp.ne.s32.totalorder %s121, %s124
    %p130 = scmp.eq.s32.totalorder %s9, 0
    %p131 = por %p129, %p130
    %p132 = scmp.ne.s32.totalorder %s121, %s124
    %p133 = scmp.eq.s32.totalorder %s14, 1
    %p134 = por %p132, %p133
    %p135 = scmp.ne.s32.totalorder %s124, %s125
    %p136 = scmp.eq.s32.totalorder %s14, 0
    %p137 = por %p135, %p136
    %p138 = scmp.ne.s32.totalorder %s124, %s125
    %p139 = scmp.eq.s32.totalorder %s15, 1
    %p140 = por %p138, %p139
    %p142 = scmp.ne.s32.totalorder %s125, %s141
    %p143 = scmp.eq.s32.totalorder %s15, 0
    %p144 = por %p142, %p143
    %p145 = scmp.le.s32.totalorder 1, %s9
    %p146 = scmp.lt.s32.totalorder %s9, 3
    %p147 = pnand %p145, %p146
    %p148 = pneg %p147
    // Predicated region
    $region9: #{ofd_loss.2} parent=5 // pred_check
      _
    $region10: #{ofd_loss.2} parent=5 // pred_check_branch
      %150 = sbr.rel (%p147) target = $region12
    $region11: #{ofd_loss.2} parent=5 // pred_region
      %s151 = ssub.s32 %s9, 1
      // Predicated region
      $region13: #{ofd_loss.2} parent=11 // pred_check
        %p152 = pneg %p109
      $region14: #{ofd_loss.2} parent=11 // pred_check_branch
        %154 = sbr.rel (%p152) target = $region16
      $region15: #{ofd_loss.2} parent=11 // pred_region
        _
      $region16: #{ofd_loss.2} parent=11 // pred_fallthru
        _
    $region12: #{ofd_loss.2} parent=5 // pred_fallthru
      _
    %p155 = scmp.lt.s32.totalorder %s9, 2
    // Predicated region
    $region17: #{ofd_loss.2} parent=5 // pred_check
      %p156 = pneg %p155
    $region18: #{ofd_loss.2} parent=5 // pred_check_branch
      %158 = sbr.rel (%p156) target = $region20
    $region19: #{ofd_loss.2} parent=5 // pred_region
      // Predicated region
      $region21: #{ofd_loss.2} parent=19 // pred_check
        %p159 = pneg %p52
      $region22: #{ofd_loss.2} parent=19 // pred_check_branch
        %161 = sbr.rel (%p159) target = $region24
      $region23: #{ofd_loss.2} parent=19 // pred_region
        %s162 = sadd.s32 %s17, %s18
        %s163 = smul.u32 2, %s162
        %p164 = scmp.lt.s32.totalorder %s16, 1
        %s165 = scalar_select %p164, %s16, 1
        %p166 = scmp.lt.s32.totalorder %s163, 1
        %s167 = scalar_select %p166, %s163, 1
        %s168 = smul.addr %s165, 2
        %s169 = sadd.s32 %s167, %s168
        %s170 = smul.addr %s169, 4
        %s171 = scalar_lea.vmem %s0, %s170
        %s172 = sadd.s32 %s17, %s18
        %s173 = smul.u32 2, %s172
      $region24: #{ofd_loss.2} parent=19 // pred_fallthru
        _
      // Predicated region
      $region25: #{ofd_loss.2} parent=19 // pred_check
        %p174 = pneg %p82
      $region26: #{ofd_loss.2} parent=19 // pred_check_branch
        %176 = sbr.rel (%p174) target = $region28
      $region27: #{ofd_loss.2} parent=19 // pred_region
        %s177 = sadd.s32 %s17, %s18
        %s178 = smul.u32 2, %s177
        %p179 = scmp.lt.s32.totalorder %s16, 1
        %s180 = scalar_select %p179, %s16, 1
        %p181 = scmp.lt.s32.totalorder %s178, 1
        %s182 = scalar_select %p181, %s178, 1
        %s183 = smul.addr %s180, 2
        %s184 = sadd.s32 %s182, %s183
        %s185 = smul.addr %s184, 8
        %s186 = scalar_lea.vmem %s1, %s185
        %s187 = sadd.s32 %s17, %s18
        %s188 = smul.u32 2, %s187
      $region28: #{ofd_loss.2} parent=19 // pred_fallthru
        _
    $region20: #{ofd_loss.2} parent=5 // pred_fallthru
      _
    %p189 = scmp.le.s32.totalorder 1, %s9
    %p190 = scmp.lt.s32.totalorder %s9, 3
    %p191 = pnand %p189, %p190
    %p192 = pneg %p191
    // Predicated region
    $region29: #{ofd_loss.2} parent=5 // pred_check
      _
    $region30: #{ofd_loss.2} parent=5 // pred_check_branch
      %194 = sbr.rel (%p191) target = $region32
    $region31: #{ofd_loss.2} parent=5 // pred_region
      %s195 = ssub.s32 %s9, 1
      %s196 = sadd.s32 %s20, %s21
      %s197 = smul.u32 2, %s196
      %p198 = scmp.lt.s32.totalorder %s19, 1
      %s199 = scalar_select %p198, %s19, 1
      %p200 = scmp.lt.s32.totalorder %s197, 1
      %s201 = scalar_select %p200, %s197, 1
      %s202 = smul.addr %s199, 2
      %s203 = sadd.s32 %s201, %s202
      %s204 = smul.addr %s203, 4
      %s205 = scalar_lea.vmem %s0, %s204
      %p206 = pneg %p58
      %p207 = pneg %p55
      %s208 = sadd.s32 %s20, %s21
      %s209 = smul.u32 2, %s208
      %p210 = scmp.lt.s32.totalorder %s19, 1
      %s211 = scalar_select %p210, %s19, 1
      %p212 = scmp.lt.s32.totalorder %s209, 1
      %s213 = scalar_select %p212, %s209, 1
      %s214 = smul.addr %s211, 2
      %s215 = sadd.s32 %s213, %s214
      %s216 = smul.addr %s215, 8
      %s217 = scalar_lea.vmem %s1, %s216
      %p218 = pneg %p88
      %p219 = pneg %p85
      %p220 = pneg %p109
      %p221 = pneg %p106
      %p222 = pneg %p137
      %p223 = pneg %p134
      %p224 = scmp.lt.s32.totalorder %s19, 1
      %s225 = scalar_select %p224, %s19, 1
      %p226 = scmp.lt.s32.totalorder %s20, 0
      %s227 = scalar_select %p226, %s20, 0
      %s228 = sadd.s32 %s227, %s225
      %s229 = smul.addr %s228, 8
      %s230 = scalar_lea.vmem %s3, %s229
      %s231 = sadd.s32 %s20, %s21
      %s232 = smul.u32 2, %s231
      %p233 = scmp.lt.s32.totalorder %s19, 1
      %s234 = scalar_select %p233, %s19, 1
      %p235 = scmp.lt.s32.totalorder %s232, 1
      %s236 = scalar_select %p235, %s232, 1
      %s237 = smul.addr %s234, 2
      %s238 = sadd.s32 %s236, %s237
      %s239 = smul.addr %s238, 4
      %s240 = scalar_lea.vmem %s0, %s239
      %s241 = sadd.s32 %s20, %s21
      %s242 = smul.u32 2, %s241
      %s243 = sadd.s32 %s20, %s21
      %s244 = smul.u32 2, %s243
      %p245 = scmp.lt.s32.totalorder %s19, 1
      %s246 = scalar_select %p245, %s19, 1
      %p247 = scmp.lt.s32.totalorder %s244, 1
      %s248 = scalar_select %p247, %s244, 1
      %s249 = smul.addr %s246, 2
      %s250 = sadd.s32 %s248, %s249
      %s251 = smul.addr %s250, 8
      %s252 = scalar_lea.vmem %s1, %s251
      %s253 = sadd.s32 %s20, %s21
      %s254 = smul.u32 2, %s253
      %p255 = scmp.lt.s32.totalorder %s19, 1
      %s256 = scalar_select %p255, %s19, 1
      %p257 = scmp.lt.s32.totalorder %s20, 0
      %s258 = scalar_select %p257, %s20, 0
      %s259 = sadd.s32 %s258, %s256
      %s260 = smul.addr %s259, 8
      %s261 = scalar_lea.vmem %s3, %s260
      %v262 = vld [vmem:[%s240] sm:$0xff]
      %v263 = vld [vmem:[%s252] sm:$0xff]
      %v264 = vld [vmem:[%s252 + $0x8] sm:$0xff]
      %v265 = vld [vmem:[%s2] sm:$0xff]
      %267 = vset.pattern.permute.xlu0 0
      %268 = vperm.xlu0 %267, %v265
      %v269 = vpop.permute.xlu0 %268
      %v272 = vlaneseq
      %v273 = vshrl.u32 %v272, 7
      %v274 = vsub.s32 0, %v273
      %v275 = vrot.slane %v262, %v274
      %v276 = vlaneseq
      %v277 = vshrl.u32 %v276, 7
      %v278 = vsub.s32 4, %v277
      %v279 = vrot.slane %v262, %v278
      %v282 = vlaneseq
      %v283 = vshrl.u32 %v282, 7
      %v284 = vsub.s32 0, %v283
      %v285 = vrot.slane %v275, %v284
      %v286 = vlaneseq
      %v287 = vshrl.u32 %v286, 7
      %v288 = vsub.s32 0, %v287
      %v289 = vrot.slane %v279, %v288
      %v290 = vmul.f32 %v269, %v285
      %v291 = vmul.f32 %v269, %v289
      %292 = vset.pattern.permute.xlu0 1
      %293 = vperm.xlu0 %292, %v265
      %v294 = vpop.permute.xlu0 %293
      %v296 = vlaneseq
      %v297 = vshrl.u32 %v296, 7
      %v298 = vsub.s32 1, %v297
      %v299 = vrot.slane %v262, %v298
      %v300 = vlaneseq
      %v301 = vshrl.u32 %v300, 7
      %v302 = vsub.s32 5, %v301
      %v303 = vrot.slane %v262, %v302
      %v306 = vlaneseq
      %v307 = vshrl.u32 %v306, 7
      %v308 = vsub.s32 1, %v307
      %v309 = vrot.slane %v299, %v308
      %v310 = vlaneseq
      %v311 = vshrl.u32 %v310, 7
      %v312 = vsub.s32 1, %v311
      %v313 = vrot.slane %v303, %v312
      %v314 = vmul.f32 %v294, %v309
      %v315 = vmul.f32 %v294, %v313
      %v316 = vadd.f32 %v290, %v314
      %v317 = vadd.f32 %v291, %v315
      %318 = vset.pattern.permute.xlu0 2
      %319 = vperm.xlu0 %318, %v265
      %v320 = vpop.permute.xlu0 %319
      %v322 = vlaneseq
      %v323 = vshrl.u32 %v322, 7
      %v324 = vsub.s32 2, %v323
      %v325 = vrot.slane %v262, %v324
      %v326 = vlaneseq
      %v327 = vshrl.u32 %v326, 7
      %v328 = vsub.s32 6, %v327
      %v329 = vrot.slane %v262, %v328
      %v332 = vlaneseq
      %v333 = vshrl.u32 %v332, 7
      %v334 = vsub.s32 2, %v333
      %v335 = vrot.slane %v325, %v334
      %v336 = vlaneseq
      %v337 = vshrl.u32 %v336, 7
      %v338 = vsub.s32 2, %v337
      %v339 = vrot.slane %v329, %v338
      %v340 = vmul.f32 %v320, %v335
      %v341 = vmul.f32 %v320, %v339
      %v342 = vadd.f32 %v316, %v340
      %v343 = vadd.f32 %v317, %v341
      %344 = vset.pattern.permute.xlu0 3
      %345 = vperm.xlu0 %344, %v265
      %v346 = vpop.permute.xlu0 %345
      %v348 = vlaneseq
      %v349 = vshrl.u32 %v348, 7
      %v350 = vsub.s32 3, %v349
      %v351 = vrot.slane %v262, %v350
      %v352 = vlaneseq
      %v353 = vshrl.u32 %v352, 7
      %v354 = vsub.s32 7, %v353
      %v355 = vrot.slane %v262, %v354
      %v358 = vlaneseq
      %v359 = vshrl.u32 %v358, 7
      %v360 = vsub.s32 3, %v359
      %v361 = vrot.slane %v351, %v360
      %v362 = vlaneseq
      %v363 = vshrl.u32 %v362, 7
      %v364 = vsub.s32 3, %v363
      %v365 = vrot.slane %v355, %v364
      %v366 = vmul.f32 %v346, %v361
      %v367 = vmul.f32 %v346, %v365
      %v368 = vadd.f32 %v342, %v366
      %v369 = vadd.f32 %v343, %v367
      %vm370 = vcmp.lt.f32.partialorder %v263, 0.0
      %vm371 = vcmp.lt.f32.partialorder %v264, 0.0
      %v372 = vsel %vm370, %v263, 0.0
      %v373 = vsel %vm371, %v264, 0.0
      %p374 = scmp.eq.s32.totalorder %s21, 0
      // Predicated region
      $region33: #{ofd_loss.2} parent=31 // pred_check
        %p375 = pneg %p374
      $region34: #{ofd_loss.2} parent=31 // pred_check_branch
        %377 = sbr.rel (%p375) target = $region36
      $region35: #{ofd_loss.2} parent=31 // pred_region
        %vm378 = vcmask 39936
        %379 = vst.msk [vmem:[%s261] sm:$0xff] %vm378, 0.0
        %v380 = vadd.f32 %v368, %v369
        %381 = vadd.xlane.f32.xlu0 %v380
        %v382 = vpop.xlane.xlu0 %381
        %v383 = vrcp.pop 256.0
        %v384 = vmul.f32 %v382, %v383
        %vm385 = vcmask 39968
        %386 = vst.msk [vmem:[%s261] sm:$0xff] %vm385, %v384
      $region36: #{ofd_loss.2} parent=31 // pred_fallthru
        _
      %v387 = vld [vmem:[%s261] sm:$0xff]
      %389 = vset.pattern.permute.xlu0 4
      %390 = vperm.xlu0 %389, %v387
      %v391 = vpop.permute.xlu0 %390
      %v393 = vsub.f32 %v368, %v391
      %v394 = vsub.f32 %v369, %v391
      %v395 = vadd.f32 %v372, %v373
      %396 = vadd.xlane.f32.xlu0 %v395
      %v397 = vpop.xlane.xlu0 %396
      %v398 = vadd.f32 %v387, %v397
      %vm399 = vcmask 7168
      %400 = vst.msk [vmem:[%s261] sm:$0xff] %vm399, %v398
      %v401 = vld [vmem:[%s261] sm:$0xff]
      %v402 = vsel %vm370, 1, 0
      %v403 = vsel %vm371, 1, 0
      %v404 = vcvt.s32.f32 %v402
      %v405 = vcvt.s32.f32 %v403
      %v406 = vadd.f32 %v404, %v405
      %407 = vadd.xlane.f32.xlu0 %v406
      %v408 = vpop.xlane.xlu0 %407
      %v409 = vadd.f32 %v401, %v408
      %vm410 = vcmask 15368
      %411 = vst.msk [vmem:[%s261] sm:$0xff] %vm410, %v409
      %v412 = vld [vmem:[%s261] sm:$0xff]
      %v413 = vadd.f32 %v393, %v394
      %414 = vadd.xlane.f32.xlu0 %v413
      %v415 = vpop.xlane.xlu0 %414
      %v416 = vadd.f32 %v412, %v415
      %vm417 = vcmask 23568
      %418 = vst.msk [vmem:[%s261] sm:$0xff] %vm417, %v416
      %v419 = vld [vmem:[%s261] sm:$0xff]
      %v420 = vmul.f32 %v393, %v393
      %v421 = vmul.f32 %v394, %v394
      %v422 = vadd.f32 %v420, %v421
      %423 = vadd.xlane.f32.xlu0 %v422
      %v424 = vpop.xlane.xlu0 %423
      %v425 = vadd.f32 %v419, %v424
      %vm426 = vcmask 31768
      %427 = vst.msk [vmem:[%s261] sm:$0xff] %vm426, %v425
      %p428 = scmp.lt.s32.totalorder %s19, 1
      %s429 = scalar_select %p428, %s19, 1
      %p430 = scmp.lt.s32.totalorder %s20, 0
      %s431 = scalar_select %p430, %s20, 0
      %s432 = sadd.s32 %s431, %s429
      %s433 = smul.addr %s432, 8
      %s434 = scalar_lea.vmem %s3, %s433
      // Predicated region
      $region37: #{ofd_loss.2} parent=31 // pred_check
        %p435 = pneg %p134
      $region38: #{ofd_loss.2} parent=31 // pred_check_branch
        %437 = sbr.rel (%p435) target = $region40
      $region39: #{ofd_loss.2} parent=31 // pred_region
        _
      $region40: #{ofd_loss.2} parent=31 // pred_fallthru
        _
    $region32: #{ofd_loss.2} parent=5 // pred_fallthru
      _
    %p438 = scmp.le.s32.totalorder 2, %s9
    // Predicated region
    $region41: #{ofd_loss.2} parent=5 // pred_check
      %p439 = pneg %p438
    $region42: #{ofd_loss.2} parent=5 // pred_check_branch
      %441 = sbr.rel (%p439) target = $region44
    $region43: #{ofd_loss.2} parent=5 // pred_region
      %s442 = ssub.s32 %s9, 2
      // Predicated region
      $region45: #{ofd_loss.2} parent=43 // pred_check
        %p443 = pneg %p140
      $region46: #{ofd_loss.2} parent=43 // pred_check_branch
        %445 = sbr.rel (%p443) target = $region48
      $region47: #{ofd_loss.2} parent=43 // pred_region
        %p446 = scmp.lt.s32.totalorder %s22, 1
        %s447 = scalar_select %p446, %s22, 1
        %p448 = scmp.lt.s32.totalorder %s23, 0
        %s449 = scalar_select %p448, %s23, 0
        %s450 = sadd.s32 %s449, %s447
        %s451 = smul.addr %s450, 8
        %s452 = scalar_lea.vmem %s3, %s451
      $region48: #{ofd_loss.2} parent=43 // pred_fallthru
        _
    $region44: #{ofd_loss.2} parent=5 // pred_fallthru
      _
  $region6: #{ofd_loss.2} parent=0 // loop_footer
    %s13 = sadd.s32 1, %s9
  $region7: #{ofd_loss.2} parent=0 // loop_footer_branch
    %8 = sbr.rel target = $region3
  $region8: #{ofd_loss.2} parent=0 // loop_exit
    _

// kernel: ofd_loss.3
$region0: #{ofd_loss.3}
  #allocation0 [shape = 'u32[]', space=smem, size = 0x4, offset = 0x4, fixed_abs, tag = 'smem constant byte address 0x4 - core index']
  #allocation1 [shape = 'u32[144,128]{1,0:T(1,128)}', space=vmem, size = 0x12000, scoped, tag = 'internal scratch']
  #allocation2 [shape = 'f32[8,256]{1,0:T(8,128)}', space=vmem, size = 0x2000, scoped, tag = 'scratch operand']
  %s0 = inlined_call_operand.vmem [shape: f32[2,4,256], index: 0, kind: input, shape index: {}]
  %s1 = inlined_call_operand.vmem [shape: f32[2,8,256], index: 1, kind: input, shape index: {}]
  %s2 = inlined_call_operand.vmem [shape: f32[8,4], index: 2, kind: input, shape index: {}]
  %s3 = inlined_call_operand.vmem [shape: f32[8,1], index: 3, kind: input, shape index: {}]
  %s4 = inlined_call_operand.vmem [shape: f32[8,1], index: 4, kind: input, shape index: {}]
  %s5 = inlined_call_operand.vmem [shape: f32[8,1], index: 5, kind: input, shape index: {}]
  %s6 = inlined_call_operand.vmem [shape: f32[2,1,8,1], index: 6, kind: output, shape index: {}]
  %s7 = sld [smem:[#allocation0]]
  $region65: #{ofd_loss.3} parent=0
    _
  %s9 = ssub.s32 1, %s7
  %s10 = scalar_select 0, %s9, %s7
  loop: start=0, step=1, limit=4
  $region2: #{ofd_loss.3} parent=0 // loop_pre_header
    _
  $region3: #{ofd_loss.3} parent=0 // loop_header
    %s12 = sphi 0, %s16
    %p13 = scmp.ge.s32.totalorder %s12, 4
    %s19 = sphi 0, %s38
    %s20 = sphi 0, %s34
    %s21 = sphi 0, %s30
    %s22 = sphi 0, %s19
    %s23 = sphi 0, %s20
    %s24 = sphi 0, %s21
    %s25 = sphi 0, %s22
    %s26 = sphi 0, %s23
    %s27 = sphi 0, %s24
    %s45 = sphi 0, %s47
    %s48 = sphi 0, %s45
    %s49 = sphi 0, %s48
    %s65 = sphi 0, %s49
    %s75 = sphi 0, %s77
    %s78 = sphi 0, %s75
    %s79 = sphi 0, %s78
    %s95 = sphi 0, %s79
    %s99 = sphi 0, %s99
    %s101 = sphi 0, %s99
    %s102 = sphi 0, %s101
    %s116 = sphi 0, %s102
    %s120 = sphi 0, %s120
    %s122 = sphi 0, %s120
    %s123 = sphi 0, %s122
    %s137 = sphi 0, %s123
    %s141 = sphi 0, %s141
    %s143 = sphi 0, %s141
    %s144 = sphi 0, %s143
    %s158 = sphi 0, %s144
    %s162 = sphi 0, %s162
    %s164 = sphi 0, %s162
    %s165 = sphi 0, %s164
    %s179 = sphi 0, %s165
    %s187 = sphi 0, %s189
    %s190 = sphi 0, %s187
    %s191 = sphi 0, %s190
    %s207 = sphi 0, %s191
  $region4: #{ofd_loss.3} parent=0 // loop_header_branch
    %15 = sbr.rel (%p13) target = $region8
  $region5: #{ofd_loss.3} parent=0 // loop_body
    %s17 = ssub.s32 %s12, 1
    %s18 = ssub.s32 %s12, 2
    %s28 = sadd.s32 1, %s21
    %p29 = scmp.ge.s32.totalorder %s28, 1
    %s30 = scalar_select %p29, 0, %s28
    %s31 = sadd.s32 1, %s20
    %s32 = scalar_select %p29, %s31, %s20
    %p33 = scmp.ge.s32.totalorder %s32, 1
    %s34 = scalar_select %p33, 0, %s32
    %s35 = sadd.s32 1, %s19
    %s36 = scalar_select %p33, %s35, %s19
    %p37 = scmp.ge.s32.totalorder %s36, 2
    %s38 = scalar_select %p37, 0, %s36
    %s39 = sadd.s32 %s20, %s21
    %s40 = sadd.s32 %s34, %s30
    %s41 = ssub.s32 %s19, %s38
    %s42 = ssub.s32 %s39, %s40
    %s43 = sor.u32 %s41, %s42
    %p44 = scmp.eq.s32.totalorder %s43, 0
    %s46 = sadd.s32 %s45, 1
    %s47 = scalar_select %p44, %s45, %s46
    %p50 = pneg %p44
    %p51 = scmp.eq.s32.totalorder %s12, 1
    %p52 = por %p50, %p51
    %p53 = scmp.ne.s32.totalorder %s45, %s48
    %p54 = scmp.eq.s32.totalorder %s12, 0
    %p55 = por %p53, %p54
    %p56 = scmp.ne.s32.totalorder %s45, %s48
    %p57 = scmp.eq.s32.totalorder %s17, 1
    %p58 = por %p56, %p57
    %p59 = scmp.ne.s32.totalorder %s48, %s49
    %p60 = scmp.eq.s32.totalorder %s17, 0
    %p61 = por %p59, %p60
    %p62 = scmp.ne.s32.totalorder %s48, %s49
    %p63 = scmp.eq.s32.totalorder %s18, 1
    %p64 = por %p62, %p63
    %p66 = scmp.ne.s32.totalorder %s49, %s65
    %p67 = scmp.eq.s32.totalorder %s18, 0
    %p68 = por %p66, %p67
    %s69 = sadd.s32 %s20, %s21
    %s70 = sadd.s32 %s34, %s30
    %s71 = ssub.s32 %s19, %s38
    %s72 = ssub.s32 %s69, %s70
    %s73 = sor.u32 %s71, %s72
    %p74 = scmp.eq.s32.totalorder %s73, 0
    %s76 = sadd.s32 %s75, 1
    %s77 = scalar_select %p74, %s75, %s76
    %p80 = pneg %p74
    %p81 = scmp.eq.s32.totalorder %s12, 1
    %p82 = por %p80, %p81
    %p83 = scmp.ne.s32.totalorder %s75, %s78
    %p84 = scmp.eq.s32.totalorder %s12, 0
    %p85 = por %p83, %p84
    %p86 = scmp.ne.s32.totalorder %s75, %s78
    %p87 = scmp.eq.s32.totalorder %s17, 1
    %p88 = por %p86, %p87
    %p89 = scmp.ne.s32.totalorder %s78, %s79
    %p90 = scmp.eq.s32.totalorder %s17, 0
    %p91 = por %p89, %p90
    %p92 = scmp.ne.s32.totalorder %s78, %s79
    %p93 = scmp.eq.s32.totalorder %s18, 1
    %p94 = por %p92, %p93
    %p96 = scmp.ne.s32.totalorder %s79, %s95
    %p97 = scmp.eq.s32.totalorder %s18, 0
    %p98 = por %p96, %p97
    %s100 = sadd.s32 %s99, 1
    %p103 = scmp.eq.s32.totalorder %s12, 1
    %p104 = scmp.ne.s32.totalorder %s99, %s101
    %p105 = scmp.eq.s32.totalorder %s12, 0
    %p106 = por %p104, %p105
    %p107 = scmp.ne.s32.totalorder %s99, %s101
    %p108 = scmp.eq.s32.totalorder %s17, 1
    %p109 = por %p107, %p108
    %p110 = scmp.ne.s32.totalorder %s101, %s102
    %p111 = scmp.eq.s32.totalorder %s17, 0
    %p112 = por %p110, %p111
    %p113 = scmp.ne.s32.totalorder %s101, %s102
    %p114 = scmp.eq.s32.totalorder %s18, 1
    %p115 = por %p113, %p114
    %p117 = scmp.ne.s32.totalorder %s102, %s116
    %p118 = scmp.eq.s32.totalorder %s18, 0
    %p119 = por %p117, %p118
    %s121 = sadd.s32 %s120, 1
    %p124 = scmp.eq.s32.totalorder %s12, 1
    %p125 = scmp.ne.s32.totalorder %s120, %s122
    %p126 = scmp.eq.s32.totalorder %s12, 0
    %p127 = por %p125, %p126
    %p128 = scmp.ne.s32.totalorder %s120, %s122
    %p129 = scmp.eq.s32.totalorder %s17, 1
    %p130 = por %p128, %p129
    %p131 = scmp.ne.s32.totalorder %s122, %s123
    %p132 = scmp.eq.s32.totalorder %s17, 0
    %p133 = por %p131, %p132
    %p134 = scmp.ne.s32.totalorder %s122, %s123
    %p135 = scmp.eq.s32.totalorder %s18, 1
    %p136 = por %p134, %p135
    %p138 = scmp.ne.s32.totalorder %s123, %s137
    %p139 = scmp.eq.s32.totalorder %s18, 0
    %p140 = por %p138, %p139
    %s142 = sadd.s32 %s141, 1
    %p145 = scmp.eq.s32.totalorder %s12, 1
    %p146 = scmp.ne.s32.totalorder %s141, %s143
    %p147 = scmp.eq.s32.totalorder %s12, 0
    %p148 = por %p146, %p147
    %p149 = scmp.ne.s32.totalorder %s141, %s143
    %p150 = scmp.eq.s32.totalorder %s17, 1
    %p151 = por %p149, %p150
    %p152 = scmp.ne.s32.totalorder %s143, %s144
    %p153 = scmp.eq.s32.totalorder %s17, 0
    %p154 = por %p152, %p153
    %p155 = scmp.ne.s32.totalorder %s143, %s144
    %p156 = scmp.eq.s32.totalorder %s18, 1
    %p157 = por %p155, %p156
    %p159 = scmp.ne.s32.totalorder %s144, %s158
    %p160 = scmp.eq.s32.totalorder %s18, 0
    %p161 = por %p159, %p160
    %s163 = sadd.s32 %s162, 1
    %p166 = scmp.eq.s32.totalorder %s12, 1
    %p167 = scmp.ne.s32.totalorder %s162, %s164
    %p168 = scmp.eq.s32.totalorder %s12, 0
    %p169 = por %p167, %p168
    %p170 = scmp.ne.s32.totalorder %s162, %s164
    %p171 = scmp.eq.s32.totalorder %s17, 1
    %p172 = por %p170, %p171
    %p173 = scmp.ne.s32.totalorder %s164, %s165
    %p174 = scmp.eq.s32.totalorder %s17, 0
    %p175 = por %p173, %p174
    %p176 = scmp.ne.s32.totalorder %s164, %s165
    %p177 = scmp.eq.s32.totalorder %s18, 1
    %p178 = por %p176, %p177
    %p180 = scmp.ne.s32.totalorder %s165, %s179
    %p181 = scmp.eq.s32.totalorder %s18, 0
    %p182 = por %p180, %p181
    %s183 = ssub.s32 %s19, %s38
    %s184 = ssub.s32 %s20, %s34
    %s185 = sor.u32 %s183, %s184
    %p186 = scmp.eq.s32.totalorder %s185, 0
    %s188 = sadd.s32 %s187, 1
    %s189 = scalar_select %p186, %s187, %s188
    %p192 = pneg %p186
    %p193 = scmp.eq.s32.totalorder %s12, 1
    %p194 = por %p192, %p193
    %p195 = scmp.ne.s32.totalorder %s187, %s190
    %p196 = scmp.eq.s32.totalorder %s12, 0
    %p197 = por %p195, %p196
    %p198 = scmp.ne.s32.totalorder %s187, %s190
    %p199 = scmp.eq.s32.totalorder %s17, 1
    %p200 = por %p198, %p199
    %p201 = scmp.ne.s32.totalorder %s190, %s191
    %p202 = scmp.eq.s32.totalorder %s17, 0
    %p203 = por %p201, %p202
    %p204 = scmp.ne.s32.totalorder %s190, %s191
    %p205 = scmp.eq.s32.totalorder %s18, 1
    %p206 = por %p204, %p205
    %p208 = scmp.ne.s32.totalorder %s191, %s207
    %p209 = scmp.eq.s32.totalorder %s18, 0
    %p210 = por %p208, %p209
    %p211 = scmp.le.s32.totalorder 1, %s12
    %p212 = scmp.lt.s32.totalorder %s12, 3
    %p213 = pnand %p211, %p212
    %p214 = pneg %p213
    // Predicated region
    $region9: #{ofd_loss.3} parent=5 // pred_check
      _
    $region10: #{ofd_loss.3} parent=5 // pred_check_branch
      %216 = sbr.rel (%p213) target = $region12
    $region11: #{ofd_loss.3} parent=5 // pred_region
      %s217 = ssub.s32 %s12, 1
      // Predicated region
      $region13: #{ofd_loss.3} parent=11 // pred_check
        %p218 = pneg %p112
      $region14: #{ofd_loss.3} parent=11 // pred_check_branch
        %220 = sbr.rel (%p218) target = $region16
      $region15: #{ofd_loss.3} parent=11 // pred_region
        _
      $region16: #{ofd_loss.3} parent=11 // pred_fallthru
        _
      // Predicated region
      $region17: #{ofd_loss.3} parent=11 // pred_check
        %p221 = pneg %p133
      $region18: #{ofd_loss.3} parent=11 // pred_check_branch
        %223 = sbr.rel (%p221) target = $region20
      $region19: #{ofd_loss.3} parent=11 // pred_region
        _
      $region20: #{ofd_loss.3} parent=11 // pred_fallthru
        _
      // Predicated region
      $region21: #{ofd_loss.3} parent=11 // pred_check
        %p224 = pneg %p154
      $region22: #{ofd_loss.3} parent=11 // pred_check_branch
        %226 = sbr.rel (%p224) target = $region24
      $region23: #{ofd_loss.3} parent=11 // pred_region
        _
      $region24: #{ofd_loss.3} parent=11 // pred_fallthru
        _
      // Predicated region
      $region25: #{ofd_loss.3} parent=11 // pred_check
        %p227 = pneg %p175
      $region26: #{ofd_loss.3} parent=11 // pred_check_branch
        %229 = sbr.rel (%p227) target = $region28
      $region27: #{ofd_loss.3} parent=11 // pred_region
        _
      $region28: #{ofd_loss.3} parent=11 // pred_fallthru
        _
    $region12: #{ofd_loss.3} parent=5 // pred_fallthru
      _
    %p230 = scmp.lt.s32.totalorder %s12, 2
    // Predicated region
    $region29: #{ofd_loss.3} parent=5 // pred_check
      %p231 = pneg %p230
    $region30: #{ofd_loss.3} parent=5 // pred_check_branch
      %233 = sbr.rel (%p231) target = $region32
    $region31: #{ofd_loss.3} parent=5 // pred_region
      // Predicated region
      $region33: #{ofd_loss.3} parent=31 // pred_check
        %p234 = pneg %p55
      $region34: #{ofd_loss.3} parent=31 // pred_check_branch
        %236 = sbr.rel (%p234) target = $region36
      $region35: #{ofd_loss.3} parent=31 // pred_region
        %s237 = sadd.s32 %s20, %s21
        %s238 = smul.u32 2, %s237
        %p239 = scmp.lt.s32.totalorder %s19, 1
        %s240 = scalar_select %p239, %s19, 1
        %p241 = scmp.lt.s32.totalorder %s238, 1
        %s242 = scalar_select %p241, %s238, 1
        %s243 = smul.addr %s240, 2
        %s244 = sadd.s32 %s242, %s243
        %s245 = smul.addr %s244, 4
        %s246 = scalar_lea.vmem %s0, %s245
        %s247 = sadd.s32 %s20, %s21
        %s248 = smul.u32 2, %s247
      $region36: #{ofd_loss.3} parent=31 // pred_fallthru
        _
      // Predicated region
      $region37: #{ofd_loss.3} parent=31 // pred_check
        %p249 = pneg %p85
      $region38: #{ofd_loss.3} parent=31 // pred_check_branch
        %251 = sbr.rel (%p249) target = $region40
      $region39: #{ofd_loss.3} parent=31 // pred_region
        %s252 = sadd.s32 %s20, %s21
        %s253 = smul.u32 2, %s252
        %p254 = scmp.lt.s32.totalorder %s19, 1
        %s255 = scalar_select %p254, %s19, 1
        %p256 = scmp.lt.s32.totalorder %s253, 1
        %s257 = scalar_select %p256, %s253, 1
        %s258 = smul.addr %s255, 2
        %s259 = sadd.s32 %s257, %s258
        %s260 = smul.addr %s259, 8
        %s261 = scalar_lea.vmem %s1, %s260
        %s262 = sadd.s32 %s20, %s21
        %s263 = smul.u32 2, %s262
      $region40: #{ofd_loss.3} parent=31 // pred_fallthru
        _
    $region32: #{ofd_loss.3} parent=5 // pred_fallthru
      _
    %p264 = scmp.le.s32.totalorder 1, %s12
    %p265 = scmp.lt.s32.totalorder %s12, 3
    %p266 = pnand %p264, %p265
    %p267 = pneg %p266
    // Predicated region
    $region41: #{ofd_loss.3} parent=5 // pred_check
      _
    $region42: #{ofd_loss.3} parent=5 // pred_check_branch
      %269 = sbr.rel (%p266) target = $region44
    $region43: #{ofd_loss.3} parent=5 // pred_region
      %s270 = ssub.s32 %s12, 1
      %s271 = sadd.s32 %s23, %s24
      %s272 = smul.u32 2, %s271
      %p273 = scmp.lt.s32.totalorder %s22, 1
      %s274 = scalar_select %p273, %s22, 1
      %p275 = scmp.lt.s32.totalorder %s272, 1
      %s276 = scalar_select %p275, %s272, 1
      %s277 = smul.addr %s274, 2
      %s278 = sadd.s32 %s276, %s277
      %s279 = smul.addr %s278, 4
      %s280 = scalar_lea.vmem %s0, %s279
      %p281 = pneg %p61
      %p282 = pneg %p58
      %s283 = sadd.s32 %s23, %s24
      %s284 = smul.u32 2, %s283
      %p285 = scmp.lt.s32.totalorder %s22, 1
      %s286 = scalar_select %p285, %s22, 1
      %p287 = scmp.lt.s32.totalorder %s284, 1
      %s288 = scalar_select %p287, %s284, 1
      %s289 = smul.addr %s286, 2
      %s290 = sadd.s32 %s288, %s289
      %s291 = smul.addr %s290, 8
      %s292 = scalar_lea.vmem %s1, %s291
      %p293 = pneg %p91
      %p294 = pneg %p88
      %p295 = pneg %p112
      %p296 = pneg %p109
      %p297 = pneg %p133
      %p298 = pneg %p130
      %p299 = pneg %p154
      %p300 = pneg %p151
      %p301 = pneg %p175
      %p302 = pneg %p172
      %p303 = pneg %p203
      %p304 = pneg %p200
      %p305 = scmp.lt.s32.totalorder %s22, 1
      %s306 = scalar_select %p305, %s22, 1
      %p307 = scmp.lt.s32.totalorder %s23, 0
      %s308 = scalar_select %p307, %s23, 0
      %s309 = sadd.s32 %s308, %s306
      %s310 = smul.addr %s309, 8
      %s311 = scalar_lea.vmem %s6, %s310
      %s312 = sadd.s32 %s23, %s24
      %s313 = smul.u32 2, %s312
      %p314 = scmp.lt.s32.totalorder %s22, 1
      %s315 = scalar_select %p314, %s22, 1
      %p316 = scmp.lt.s32.totalorder %s313, 1
      %s317 = scalar_select %p316, %s313, 1
      %s318 = smul.addr %s315, 2
      %s319 = sadd.s32 %s317, %s318
      %s320 = smul.addr %s319, 4
      %s321 = scalar_lea.vmem %s0, %s320
      %s322 = sadd.s32 %s23, %s24
      %s323 = smul.u32 2, %s322
      %s324 = sadd.s32 %s23, %s24
      %s325 = smul.u32 2, %s324
      %p326 = scmp.lt.s32.totalorder %s22, 1
      %s327 = scalar_select %p326, %s22, 1
      %p328 = scmp.lt.s32.totalorder %s325, 1
      %s329 = scalar_select %p328, %s325, 1
      %s330 = smul.addr %s327, 2
      %s331 = sadd.s32 %s329, %s330
      %s332 = smul.addr %s331, 8
      %s333 = scalar_lea.vmem %s1, %s332
      %s334 = sadd.s32 %s23, %s24
      %s335 = smul.u32 2, %s334
      %p336 = scmp.lt.s32.totalorder %s22, 1
      %s337 = scalar_select %p336, %s22, 1
      %p338 = scmp.lt.s32.totalorder %s23, 0
      %s339 = scalar_select %p338, %s23, 0
      %s340 = sadd.s32 %s339, %s337
      %s341 = smul.addr %s340, 8
      %s342 = scalar_lea.vmem %s6, %s341
      %p343 = scmp.eq.s32.totalorder %s24, 0
      // Predicated region
      $region45: #{ofd_loss.3} parent=43 // pred_check
        %p344 = pneg %p343
      $region46: #{ofd_loss.3} parent=43 // pred_check_branch
        %346 = sbr.rel (%p344) target = $region48
      $region47: #{ofd_loss.3} parent=43 // pred_region
        %347 = vst [vmem:[#allocation2] sm:$0xff] 0.0
        %348 = vst [vmem:[#allocation2 + $0x8] sm:$0xff] 0.0
      $region48: #{ofd_loss.3} parent=43 // pred_fallthru
        _
      %v349 = vld [vmem:[%s321] sm:$0xff]
      %v350 = vld [vmem:[%s333] sm:$0xff]
      %v351 = vld [vmem:[%s333 + $0x8] sm:$0xff]
      %v352 = vld [vmem:[%s2] sm:$0xff]
      %v353 = vld [vmem:[%s3] sm:$0xff]
      %355 = vset.pattern.permute.xlu0 0
      %356 = vperm.xlu0 %355, %v353
      %v357 = vpop.permute.xlu0 %356
      %v359 = vmax.f32 %v350, %v357
      %v360 = vmax.f32 %v351, %v357
      %362 = vset.pattern.permute.xlu0 0
      %363 = vperm.xlu0 %362, %v352
      %v364 = vpop.permute.xlu0 %363
      %v367 = vlaneseq
      %v368 = vshrl.u32 %v367, 7
      %v369 = vsub.s32 0, %v368
      %v370 = vrot.slane %v349, %v369
      %v371 = vlaneseq
      %v372 = vshrl.u32 %v371, 7
      %v373 = vsub.s32 4, %v372
      %v374 = vrot.slane %v349, %v373
      %v377 = vlaneseq
      %v378 = vshrl.u32 %v377, 7
      %v379 = vsub.s32 0, %v378
      %v380 = vrot.slane %v370, %v379
      %v381 = vlaneseq
      %v382 = vshrl.u32 %v381, 7
      %v383 = vsub.s32 0, %v382
      %v384 = vrot.slane %v374, %v383
      %v385 = vmul.f32 %v364, %v380
      %v386 = vmul.f32 %v364, %v384
      %387 = vset.pattern.permute.xlu0 1
      %388 = vperm.xlu0 %387, %v352
      %v389 = vpop.permute.xlu0 %388
      %v391 = vlaneseq
      %v392 = vshrl.u32 %v391, 7
      %v393 = vsub.s32 1, %v392
      %v394 = vrot.slane %v349, %v393
      %v395 = vlaneseq
      %v396 = vshrl.u32 %v395, 7
      %v397 = vsub.s32 5, %v396
      %v398 = vrot.slane %v349, %v397
      %v401 = vlaneseq
      %v402 = vshrl.u32 %v401, 7
      %v403 = vsub.s32 1, %v402
      %v404 = vrot.slane %v394, %v403
      %v405 = vlaneseq
      %v406 = vshrl.u32 %v405, 7
      %v407 = vsub.s32 1, %v406
      %v408 = vrot.slane %v398, %v407
      %v409 = vmul.f32 %v389, %v404
      %v410 = vmul.f32 %v389, %v408
      %v411 = vadd.f32 %v385, %v409
      %v412 = vadd.f32 %v386, %v410
      %413 = vset.pattern.permute.xlu0 2
      %414 = vperm.xlu0 %413, %v352
      %v415 = vpop.permute.xlu0 %414
      %v417 = vlaneseq
      %v418 = vshrl.u32 %v417, 7
      %v419 = vsub.s32 2, %v418
      %v420 = vrot.slane %v349, %v419
      %v421 = vlaneseq
      %v422 = vshrl.u32 %v421, 7
      %v423 = vsub.s32 6, %v422
      %v424 = vrot.slane %v349, %v423
      %v427 = vlaneseq
      %v428 = vshrl.u32 %v427, 7
      %v429 = vsub.s32 2, %v428
      %v430 = vrot.slane %v420, %v429
      %v431 = vlaneseq
      %v432 = vshrl.u32 %v431, 7
      %v433 = vsub.s32 2, %v432
      %v434 = vrot.slane %v424, %v433
      %v435 = vmul.f32 %v415, %v430
      %v436 = vmul.f32 %v415, %v434
      %v437 = vadd.f32 %v411, %v435
      %v438 = vadd.f32 %v412, %v436
      %439 = vset.pattern.permute.xlu0 3
      %440 = vperm.xlu0 %439, %v352
      %v441 = vpop.permute.xlu0 %440
      %v443 = vlaneseq
      %v444 = vshrl.u32 %v443, 7
      %v445 = vsub.s32 3, %v444
      %v446 = vrot.slane %v349, %v445
      %v447 = vlaneseq
      %v448 = vshrl.u32 %v447, 7
      %v449 = vsub.s32 7, %v448
      %v450 = vrot.slane %v349, %v449
      %v453 = vlaneseq
      %v454 = vshrl.u32 %v453, 7
      %v455 = vsub.s32 3, %v454
      %v456 = vrot.slane %v446, %v455
      %v457 = vlaneseq
      %v458 = vshrl.u32 %v457, 7
      %v459 = vsub.s32 3, %v458
      %v460 = vrot.slane %v450, %v459
      %v461 = vmul.f32 %v441, %v456
      %v462 = vmul.f32 %v441, %v460
      %v463 = vadd.f32 %v437, %v461
      %v464 = vadd.f32 %v438, %v462
      %v465 = vld [vmem:[%s4] sm:$0xff]
      %467 = vset.pattern.permute.xlu0 0
      %468 = vperm.xlu0 %467, %v465
      %v469 = vpop.permute.xlu0 %468
      %v471 = vsub.f32 %v463, %v469
      %v472 = vsub.f32 %v464, %v469
      %v473 = vld [vmem:[%s5] sm:$0xff]
      %475 = vset.pattern.permute.xlu0 0
      %476 = vperm.xlu0 %475, %v473
      %v477 = vpop.permute.xlu0 %476
      %v479 = vmul.f32 %v471, %v477
      %v480 = vmul.f32 %v472, %v477
      %v481 = vsub.f32 %v479, %v359
      %v482 = vsub.f32 %v480, %v360
      %vm483 = vcmp.gt.f32.partialorder %v479, %v359
      %vm484 = vcmp.gt.f32.partialorder %v480, %v360
      %vm485 = vcmp.gt.f32.partialorder %v359, 0.0
      %vm486 = vcmp.gt.f32.partialorder %v360, 0.0
      %vm487 = vmor %vm483, %vm485
      %vm488 = vmor %vm484, %vm486
      %v489 = vld [vmem:[#allocation2] sm:$0xff]
      %v490 = vld [vmem:[#allocation2 + $0x8] sm:$0xff]
      %v491 = vmul.f32 %v481, %v481
      %v492 = vmul.f32 %v482, %v482
      %v493 = vsel %vm487, %v491, 0.0
      %v494 = vsel %vm488, %v492, 0.0
      %v495 = vadd.f32 %v489, %v493
      %v496 = vadd.f32 %v490, %v494
      %497 = vst [vmem:[#allocation2] sm:$0xff] %v495
      %498 = vst [vmem:[#allocation2 + $0x8] sm:$0xff] %v496
      // Predicated region
      $region49: #{ofd_loss.3} parent=43 // pred_check
        %p499 = pneg %p343
      $region50: #{ofd_loss.3} parent=43 // pred_check_branch
        %501 = sbr.rel (%p499) target = $region52
      $region51: #{ofd_loss.3} parent=43 // pred_region
        %v502 = vld [vmem:[#allocation2] sm:$0xff]
        %v503 = vld [vmem:[#allocation2 + $0x8] sm:$0xff]
        %v504 = vadd.f32 %v502, %v503
        %505 = vadd.xlane.f32.xlu0 %v504
        %v506 = vpop.xlane.xlu0 %505
        %vm507 = vcmask 7168
        %508 = vst.msk [vmem:[%s342] sm:$0xff] %vm507, %v506
      $region52: #{ofd_loss.3} parent=43 // pred_fallthru
        _
      %p509 = scmp.lt.s32.totalorder %s22, 1
      %s510 = scalar_select %p509, %s22, 1
      %p511 = scmp.lt.s32.totalorder %s23, 0
      %s512 = scalar_select %p511, %s23, 0
      %s513 = sadd.s32 %s512, %s510
      %s514 = smul.addr %s513, 8
      %s515 = scalar_lea.vmem %s6, %s514
      // Predicated region
      $region53: #{ofd_loss.3} parent=43 // pred_check
        %p516 = pneg %p200
      $region54: #{ofd_loss.3} parent=43 // pred_check_branch
        %518 = sbr.rel (%p516) target = $region56
      $region55: #{ofd_loss.3} parent=43 // pred_region
        _
      $region56: #{ofd_loss.3} parent=43 // pred_fallthru
        _
    $region44: #{ofd_loss.3} parent=5 // pred_fallthru
      _
    %p519 = scmp.le.s32.totalorder 2, %s12
    // Predicated region
    $region57: #{ofd_loss.3} parent=5 // pred_check
      %p520 = pneg %p519
    $region58: #{ofd_loss.3} parent=5 // pred_check_branch
      %522 = sbr.rel (%p520) target = $region60
    $region59: #{ofd_loss.3} parent=5 // pred_region
      %s523 = ssub.s32 %s12, 2
      // Predicated region
      $region61: #{ofd_loss.3} parent=59 // pred_check
        %p524 = pneg %p206
      $region62: #{ofd_loss.3} parent=59 // pred_check_branch
        %526 = sbr.rel (%p524) target = $region64
      $region63: #{ofd_loss.3} parent=59 // pred_region
        %p527 = scmp.lt.s32.totalorder %s25, 1
        %s528 = scalar_select %p527, %s25, 1
        %p529 = scmp.lt.s32.totalorder %s26, 0
        %s530 = scalar_select %p529, %s26, 0
        %s531 = sadd.s32 %s530, %s528
        %s532 = smul.addr %s531, 8
        %s533 = scalar_lea.vmem %s6, %s532
      $region64: #{ofd_loss.3} parent=59 // pred_fallthru
        _
    $region60: #{ofd_loss.3} parent=5 // pred_fallthru
      _
  $region6: #{ofd_loss.3} parent=0 // loop_footer
    %s16 = sadd.s32 1, %s12
  $region7: #{ofd_loss.3} parent=0 // loop_footer_branch
    %11 = sbr.rel target = $region3
  $region8: #{ofd_loss.3} parent=0 // loop_exit
    _

</llo_original>
